<compile_context>
chip_gen: v7x
topology: tpu7x:2x2x1
jax: 0.10.0
libtpu: 0.0.40
codegen_flags: <defaults>
</compile_context>

<pallas_src>
import functools
import math

import jax
import jax.numpy as jnp
from jax.experimental import pallas as pl
from jax.experimental.pallas import tpu as pltpu


# -----------------------------------------------------------------------------
# Pallas attention kernel: softmax(q @ k^T * scale) @ v, batched over heads.
# -----------------------------------------------------------------------------
def _attention_kernel(q_ref, k_ref, v_ref, o_ref, *, scale, kv_len):
    # q_ref: [Hb, Tq, D]   k_ref, v_ref: [Hb, Tkp, D]   o_ref: [Hb, Tq, D]
    q = q_ref[...] * scale          # fold 1/sqrt(d_head) into q (Tq*D muls)
    k = k_ref[...]
    v = v_ref[...]

    # scores[h, i, j] = sum_d q[h, i, d] * k[h, j, d]  (no transposes; bf16
    # operands, f32 accumulation on the MXU).
    s = jax.lax.dot_general(
        q, k,
        dimension_numbers=(((2,), (2,)), ((0,), (0,))),
        preferred_element_type=jnp.float32,
    )                                                   # [Hb, Tq, Tkp] f32

    # Static masking of the zero-padded key columns (exact softmax).
    if kv_len < k_ref.shape[1]:
        col = jax.lax.broadcasted_iota(jnp.int32, s.shape, 2)
        s = jnp.where(col < kv_len, s, -1e30)

    # Online-style softmax pieces; normalization deferred past the PV matmul.
    m = jnp.max(s, axis=-1, keepdims=True)
    p = jnp.exp(s - m)                                  # unnormalized weights
    l = jnp.sum(p, axis=-1, keepdims=True)              # [Hb, Tq, 1]

    # out[h, i, d] = sum_j p[h, i, j] * v[h, j, d]      (no transposes)
    o = jax.lax.dot_general(
        p.astype(v.dtype), v,
        dimension_numbers=(((2,), (1,)), ((0,), (0,))),
        preferred_element_type=jnp.float32,
    )                                                   # [Hb, Tq, D] f32
    o = o * pl.reciprocal(l, approx=True)               # normalize on [.,Tq,D]
    o_ref[...] = o.astype(o_ref.dtype)


def pallas_attention(q, k, v, scale):
    """softmax(q @ k^T * scale) @ v for q:[BH,Tq,D], k,v:[BH,Tk,D] -> f32 [BH,Tq,D]."""
    BH, Tq, D = q.shape
    _, Tk, _ = k.shape

    # bf16 MXU operands (f32 operands cost extra MXU passes and 2x DMA bytes);
    # accumulation is f32 inside the kernel.
    cdt = jnp.bfloat16 if q.dtype == jnp.float32 else q.dtype
    q, k, v = q.astype(cdt), k.astype(cdt), v.astype(cdt)

    # Pad the key (softmax lane) axis to a multiple of 128; padded columns are
    # masked in-kernel so the result is exact.
    Tkp = pl.cdiv(Tk, 128) * 128
    if Tkp != Tk:
        k = jnp.pad(k, ((0, 0), (0, Tkp - Tk), (0, 0)))
        v = jnp.pad(v, ((0, 0), (0, Tkp - Tk), (0, 0)))

    # Query-row tiling bounds the live f32 score tile for long sequences and
    # adds parallel grid steps.
    if Tq >= 512 and Tq % 256 == 0:
        tq = 256
    elif Tq >= 256 and Tq % 128 == 0:
        tq = 128
    else:
        tq = Tq
    nq = Tq // tq

    # Heads per grid step: fill a ~6 MiB per-step budget.  Estimate counts the
    # double-buffered q/k/v/o blocks plus ~3 score-sized f32 temporaries
    # (s, exp(s), bf16 cast copy) and the f32 o temporary — conservative enough
    # for v5e's 16 MiB scoped-VMEM default, well inside v6e/v7x's 32 MiB.
    in_bytes = jnp.dtype(cdt).itemsize
    per_head = (2 * in_bytes * (tq * D + 2 * Tkp * D)   # q,k,v blocks, 2x buffered
                + 2 * 4 * tq * D                        # o block (f32), 2x buffered
                + 3 * 4 * tq * Tkp                      # score-sized temporaries
                + 4 * tq * D)                           # f32 o temporary
    budget = 6 * 1024 * 1024
    block_heads = max(1, min(BH, budget // max(per_head, 1)))
    if BH >= 2:
        # Keep >= 2 grid steps so the "parallel" axis can shard across v7x's
        # two TensorCores; harmless on single-TC v5e/v6e.
        block_heads = min(block_heads, pl.cdiv(BH, 2))

    # Pad BH to a multiple of block_heads (no divisor search).  Padded heads
    # are all-zero, produce zeros (no NaNs: masked softmax over real columns),
    # and are sliced off below.
    BHp = pl.cdiv(BH, block_heads) * block_heads
    if BHp != BH:
        padh = ((0, BHp - BH), (0, 0), (0, 0))
        q, k, v = jnp.pad(q, padh), jnp.pad(k, padh), jnp.pad(v, padh)

    cost = pl.CostEstimate(
        flops=4 * BHp * Tq * Tkp * D,
        transcendentals=BHp * Tq * Tkp,
        bytes_accessed=int(q.size + k.size + v.size) * in_bytes
                       + BHp * Tq * D * 4)

    out = pl.pallas_call(
        functools.partial(_attention_kernel, scale=scale, kv_len=Tk),
        out_shape=jax.ShapeDtypeStruct((BHp, Tq, D), jnp.float32),
        grid=(BHp // block_heads, nq),
        in_specs=[
            pl.BlockSpec((block_heads, tq, D), lambda i, j: (i, j, 0)),
            pl.BlockSpec((block_heads, Tkp, D), lambda i, j: (i, 0, 0)),
            pl.BlockSpec((block_heads, Tkp, D), lambda i, j: (i, 0, 0)),
        ],
        out_specs=pl.BlockSpec((block_heads, tq, D), lambda i, j: (i, j, 0)),
        compiler_params=pltpu.CompilerParams(
            dimension_semantics=("parallel", "parallel"),
            vmem_limit_bytes=32 * 1024 * 1024),
        cost_estimate=cost,
    )(q, k, v)
    return out[:BH] if BHp != BH else out


def reference_attention(q, k, v, scale):
    sim = jnp.einsum('bid,bjd->bij', q, k,
                     precision=jax.lax.Precision.HIGHEST) * scale
    attn = jax.nn.softmax(sim, axis=-1).astype(v.dtype)
    return jnp.einsum('bij,bjd->bid', attn, v,
                      precision=jax.lax.Precision.HIGHEST)


# -----------------------------------------------------------------------------
# The rest of SpatialTransformer (norms / 1x1 convs / linears / GEGLU) in JAX.
# -----------------------------------------------------------------------------
def _layer_norm(x, scale, bias, eps=1e-5):
    mu = jnp.mean(x, axis=-1, keepdims=True)
    var = jnp.mean(jnp.square(x - mu), axis=-1, keepdims=True)
    return (x - mu) * jax.lax.rsqrt(var + eps) * scale + bias


def _group_norm(x, scale, bias, num_groups=32, eps=1e-5):
    b, c, h, w = x.shape
    xg = x.reshape(b, num_groups, c // num_groups, h, w)
    mu = jnp.mean(xg, axis=(2, 3, 4), keepdims=True)
    var = jnp.mean(jnp.square(xg - mu), axis=(2, 3, 4), keepdims=True)
    xg = (xg - mu) * jax.lax.rsqrt(var + eps)
    return xg.reshape(b, c, h, w) * scale[None, :, None, None] + bias[None, :, None, None]


def _conv1x1(x, w, b):
    # w: [out_c, in_c]  (1x1 Conv2d)
    return jnp.einsum('bchw,oc->bohw', x, w) + b[None, :, None, None]


def _cross_attention(p, x, context, n_heads, use_pallas):
    b, n, _ = x.shape
    ctx = x if context is None else context
    m = ctx.shape[1]
    inner = p['wq'].shape[0]
    d = inner // n_heads
    scale = d ** -0.5

    # Project straight into the '(b h) n d' head-split layout by reshaping the
    # projection weights (no separate 'b n (h d) -> (b h) n d' transposes /
    # extra HBM round trips around the kernel).
    wq = p['wq'].reshape(n_heads, d, -1)     # (inner, q_dim)  -> (h, d, q_dim)
    wk = p['wk'].reshape(n_heads, d, -1)     # (inner, ctx_dim)-> (h, d, ctx_dim)
    wv = p['wv'].reshape(n_heads, d, -1)
    qh = jnp.einsum('bnc,hdc->bhnd', x, wq).reshape(b * n_heads, n, d)
    kh = jnp.einsum('bmc,hdc->bhmd', ctx, wk).reshape(b * n_heads, m, d)
    vh = jnp.einsum('bmc,hdc->bhmd', ctx, wv).reshape(b * n_heads, m, d)

    attn_fn = pallas_attention if use_pallas else reference_attention
    oh = attn_fn(qh, kh, vh, scale).reshape(b, n_heads, n, d)

    # Fold the '(b h) n d -> b n (h d)' merge into the output projection.
    wo = p['wo'].reshape(-1, n_heads, d)     # (q_dim, inner) -> (q_dim, h, d)
    return jnp.einsum('bhnd,ohd->bno', oh, wo) + p['bo']   # Dropout(p=0) == id


def _feed_forward(p, x):
    y = x @ p['w1'].T + p['b1']
    a, gate = jnp.split(y, 2, axis=-1)
    y = a * jax.nn.gelu(gate, approximate=False)   # GEGLU
    return y @ p['w2'].T + p['b2']                 # Dropout(p=0) == identity


def _basic_transformer_block(p, x, context, n_heads, use_pallas):
    x = _cross_attention(p['attn1'], _layer_norm(x, p['ln1_s'], p['ln1_b']),
                         None, n_heads, use_pallas) + x
    x = _cross_attention(p['attn2'], _layer_norm(x, p['ln2_s'], p['ln2_b']),
                         context, n_heads, use_pallas) + x
    x = _feed_forward(p['ff'], _layer_norm(x, p['ln3_s'], p['ln3_b'])) + x
    return x


def spatial_transformer_forward(params, x, context, *, n_heads, use_pallas=True):
    b, c, hh, ww = x.shape
    x_in = x
    h = _group_norm(x, params['gn_scale'], params['gn_bias'])
    h = _conv1x1(h, params['proj_in_w'], params['proj_in_b'])    # [b, inner, H, W]
    inner = params['proj_in_w'].shape[0]
    h = h.reshape(b, inner, hh * ww).transpose(0, 2, 1)          # [b, T, inner]
    for blk in params['blocks']:
        h = _basic_transformer_block(blk, h, context, n_heads, use_pallas)
    h = h.transpose(0, 2, 1).reshape(b, inner, hh, ww)           # inner == c
    h = _conv1x1(h, params['proj_out_w'], params['proj_out_b'])
    return h + x_in


# -----------------------------------------------------------------------------
# Parameter construction (random; proj_out is random instead of zero_module so
# the test actually exercises the whole path).
# -----------------------------------------------------------------------------
def _linear(key, fan_in, fan_out):
    return jax.random.normal(key, (fan_out, fan_in), dtype=jnp.float32) / math.sqrt(fan_in)


def init_params(key, in_channels, n_heads, d_head, context_dim, depth=1, ff_mult=4):
    inner = n_heads * d_head
    assert inner == in_channels, \
        "SpatialTransformer's reshape back to image requires inner_dim == in_channels"
    ff_inner = ff_mult * inner
    keys = iter(jax.random.split(key, 8 + depth * 16))

    def attn_params(q_dim, ctx_dim):
        return {
            'wq': _linear(next(keys), q_dim, inner),
            'wk': _linear(next(keys), ctx_dim, inner),
            'wv': _linear(next(keys), ctx_dim, inner),
            'wo': _linear(next(keys), inner, q_dim),
            'bo': 0.02 * jax.random.normal(next(keys), (q_dim,), jnp.float32),
        }

    blocks = []
    for _ in range(depth):
        blocks.append({
            'ln1_s': jnp.ones((inner,), jnp.float32), 'ln1_b': jnp.zeros((inner,), jnp.float32),
            'ln2_s': jnp.ones((inner,), jnp.float32), 'ln2_b': jnp.zeros((inner,), jnp.float32),
            'ln3_s': jnp.ones((inner,), jnp.float32), 'ln3_b': jnp.zeros((inner,), jnp.float32),
            'attn1': attn_params(inner, inner),
            'attn2': attn_params(inner, context_dim),
            'ff': {
                'w1': _linear(next(keys), inner, 2 * ff_inner),
                'b1': jnp.zeros((2 * ff_inner,), jnp.float32),
                'w2': _linear(next(keys), ff_inner, inner),
                'b2': jnp.zeros((inner,), jnp.float32),
            },
        })

    return {
        'gn_scale': jnp.ones((in_channels,), jnp.float32),
        'gn_bias': jnp.zeros((in_channels,), jnp.float32),
        'proj_in_w': _linear(next(keys), in_channels, inner),
        'proj_in_b': jnp.zeros((inner,), jnp.float32),
        'proj_out_w': _linear(next(keys), inner, in_channels),
        'proj_out_b': jnp.zeros((in_channels,), jnp.float32),
        'blocks': blocks,
    }


if __name__ == "__main__":
    n_heads, d_head = 2, 16
    in_channels = n_heads * d_head          # 32 (== inner_dim; GroupNorm uses 32 groups)
    b, hh, ww = 2, 8, 8                     # T = 64 spatial tokens
    context_dim, ctx_len = 48, 12           # cross-attention context

    key = jax.random.PRNGKey(0)
    k_params, k_x, k_ctx = jax.random.split(key, 3)
    params = init_params(k_params, in_channels, n_heads, d_head, context_dim)
    x = jax.random.normal(k_x, (b, in_channels, hh, ww), dtype=jnp.float32)
    context = jax.random.normal(k_ctx, (b, ctx_len, context_dim), dtype=jnp.float32)

    fwd = jax.jit(functools.partial(spatial_transformer_forward,
                                    n_heads=n_heads, use_pallas=True))
    out = jax.block_until_ready(fwd(params, x, context))

    ref_fwd = jax.jit(functools.partial(spatial_transformer_forward,
                                        n_heads=n_heads, use_pallas=False))
    ref = jax.block_until_ready(ref_fwd(params, x, context))

    assert out.shape == x.shape
    # Tolerance budget: explicit bf16 MXU operands + the EUP approximate
    # reciprocal inside the kernel vs a HIGHEST-precision f32 reference, on O(1)
    # activations, propagated through residual/FF paths.
    max_err = float(jnp.max(jnp.abs(out - ref)))
    assert max_err < 5e-2, max_err

    print("KERNEL_OK")
</pallas_src>

<mosaic_0001>
module attributes {stable_mosaic.version = 11 : i64} {
  func.func @_attention_kernel(%arg0: i32, %arg1: i32, %arg2: memref<2x64x16xbf16, #tpu.memory_space<vmem>>, %arg3: memref<2x128x16xbf16, #tpu.memory_space<vmem>>, %arg4: memref<2x128x16xbf16, #tpu.memory_space<vmem>>, %arg5: memref<2x64x16xf32, #tpu.memory_space<vmem>>) attributes {dimension_semantics = [#tpu.dimension_semantics<parallel>, #tpu.dimension_semantics<parallel>], iteration_bounds = array<i64: 2, 1>, scalar_prefetch = 0 : i64, scratch_operands = 0 : i64, tpu.core_type = #tpu.core_type<tc>, window_params = [{transform_indices = @transform_0, window_bounds = array<i64: 2, 64, 16>}, {transform_indices = @transform_1, window_bounds = array<i64: 2, 128, 16>}, {transform_indices = @transform_2, window_bounds = array<i64: 2, 128, 16>}, {transform_indices = @transform_3, window_bounds = array<i64: 2, 64, 16>}]} {
    %c0 = arith.constant 0 : index
    %c0_0 = arith.constant 0 : index
    %c0_1 = arith.constant 0 : index
    %0 = vector.load %arg2[%c0, %c0_0, %c0_1] : memref<2x64x16xbf16, #tpu.memory_space<vmem>>, vector<2x64x16xbf16>
    %cst = arith.constant 2.500000e-01 : bf16
    %1 = vector.broadcast %cst : bf16 to vector<2x64x16xbf16>
    %2 = arith.mulf %0, %1 : vector<2x64x16xbf16>
    %c0_2 = arith.constant 0 : index
    %c0_3 = arith.constant 0 : index
    %c0_4 = arith.constant 0 : index
    %3 = vector.load %arg3[%c0_2, %c0_3, %c0_4] : memref<2x128x16xbf16, #tpu.memory_space<vmem>>, vector<2x128x16xbf16>
    %c0_5 = arith.constant 0 : index
    %c0_6 = arith.constant 0 : index
    %c0_7 = arith.constant 0 : index
    %4 = vector.load %arg4[%c0_5, %c0_6, %c0_7] : memref<2x128x16xbf16, #tpu.memory_space<vmem>>, vector<2x128x16xbf16>
    %cst_8 = arith.constant dense<0.000000e+00> : vector<2x64x128xf32>
    %5 = tpu.matmul %2, %3, %cst_8 {dimension_numbers = #tpu.dot_dimension_numbers<[2], [2], [1], [1], [0, 0, 0, 1, 1, 1], [0], [0]>} : vector<2x64x16xbf16>, vector<2x128x16xbf16>, vector<2x64x128xf32> -> vector<2x64x128xf32>
    %6 = tpu.iota {dimensions = array<i32: 2>} : vector<2x64x128xi32>
    %c64_i32 = arith.constant 64 : i32
    %7 = vector.broadcast %c64_i32 : i32 to vector<2x64x128xi32>
    %8 = arith.cmpi slt, %6, %7 : vector<2x64x128xi32>
    %cst_9 = arith.constant -1.000000e+30 : f32
    %9 = vector.broadcast %cst_9 : f32 to vector<2x64x128xf32>
    %10 = arith.select %8, %5, %9 : vector<2x64x128xi1>, vector<2x64x128xf32>
    %cst_10 = arith.constant dense<0xFF800000> : vector<2x64xf32>
    %11 = vector.multi_reduction <maximumf>, %10, %cst_10 [2] : vector<2x64x128xf32> to vector<2x64xf32>
    %12 = vector.shape_cast %11 : vector<2x64xf32> to vector<2x64x1xf32>
    %13 = vector.broadcast %12 : vector<2x64x1xf32> to vector<2x64x128xf32>
    %14 = arith.subf %10, %13 : vector<2x64x128xf32>
    %15 = math.exp %14 : vector<2x64x128xf32>
    %cst_11 = arith.constant dense<0.000000e+00> : vector<2x64xf32>
    %16 = vector.multi_reduction <add>, %15, %cst_11 [2] : vector<2x64x128xf32> to vector<2x64xf32>
    %17 = vector.shape_cast %16 : vector<2x64xf32> to vector<2x64x1xf32>
    %18 = arith.truncf %15 : vector<2x64x128xf32> to vector<2x64x128xbf16>
    %cst_12 = arith.constant dense<0.000000e+00> : vector<2x64x16xf32>
    %19 = tpu.matmul %18, %4, %cst_12 {dimension_numbers = #tpu.dot_dimension_numbers<[2], [1], [1], [2], [0, 0, 0, 1, 1, 2], [0], [0]>} : vector<2x64x128xbf16>, vector<2x128x16xbf16>, vector<2x64x16xf32> -> vector<2x64x16xf32>
    %20 = tpu.reciprocal %17 {approx = true} : vector<2x64x1xf32> -> vector<2x64x1xf32>
    %21 = vector.broadcast %20 : vector<2x64x1xf32> to vector<2x64x16xf32>
    %22 = arith.mulf %19, %21 : vector<2x64x16xf32>
    %c0_13 = arith.constant 0 : index
    %c0_14 = arith.constant 0 : index
    %c0_15 = arith.constant 0 : index
    %23 = vector.load %arg5[%c0_13, %c0_14, %c0_15] : memref<2x64x16xf32, #tpu.memory_space<vmem>>, vector<2x64x16xf32>
    tpu.vector_store %arg5[%c0_13, %c0_14, %c0_15], %22 {strides = array<i32>} : memref<2x64x16xf32, #tpu.memory_space<vmem>>, vector<2x64x16xf32>,
    return
  }
  func.func @transform_0(%arg0: i32, %arg1: i32) -> (i32, i32, i32) {
    %c0_i32 = arith.constant 0 : i32
    %c0_i32_0 = arith.constant 0 : i32
    return %arg0, %arg1, %c0_i32 : i32, i32, i32
  }
  func.func @transform_1(%arg0: i32, %arg1: i32) -> (i32, i32, i32) {
    %c0_i32 = arith.constant 0 : i32
    %c0_i32_0 = arith.constant 0 : i32
    %c0_i32_1 = arith.constant 0 : i32
    return %arg0, %c0_i32, %c0_i32_0 : i32, i32, i32
  }
  func.func @transform_2(%arg0: i32, %arg1: i32) -> (i32, i32, i32) {
    %c0_i32 = arith.constant 0 : i32
    %c0_i32_0 = arith.constant 0 : i32
    %c0_i32_1 = arith.constant 0 : i32
    return %arg0, %c0_i32, %c0_i32_0 : i32, i32, i32
  }
  func.func @transform_3(%arg0: i32, %arg1: i32) -> (i32, i32, i32) {
    %c0_i32 = arith.constant 0 : i32
    %c0_i32_0 = arith.constant 0 : i32
    return %arg0, %arg1, %c0_i32 : i32, i32, i32
  }
}

module attributes {stable_mosaic.version = 11 : i64} {
  func.func @_attention_kernel(%arg0: i32, %arg1: i32, %arg2: memref<2x64x16xbf16, #tpu.memory_space<vmem>>, %arg3: memref<2x128x16xbf16, #tpu.memory_space<vmem>>, %arg4: memref<2x128x16xbf16, #tpu.memory_space<vmem>>, %arg5: memref<2x64x16xf32, #tpu.memory_space<vmem>>) attributes {dimension_semantics = [#tpu.dimension_semantics<parallel>, #tpu.dimension_semantics<parallel>], iteration_bounds = array<i64: 2, 1>, scalar_prefetch = 0 : i64, scratch_operands = 0 : i64, tpu.core_type = #tpu.core_type<tc>, window_params = [{transform_indices = @transform_0, window_bounds = array<i64: 2, 64, 16>}, {transform_indices = @transform_1, window_bounds = array<i64: 2, 128, 16>}, {transform_indices = @transform_2, window_bounds = array<i64: 2, 128, 16>}, {transform_indices = @transform_3, window_bounds = array<i64: 2, 64, 16>}]} {
    %c0 = arith.constant 0 : index
    %c0_0 = arith.constant 0 : index
    %c0_1 = arith.constant 0 : index
    %0 = vector.load %arg2[%c0, %c0_0, %c0_1] : memref<2x64x16xbf16, #tpu.memory_space<vmem>>, vector<2x64x16xbf16>
    %cst = arith.constant 2.500000e-01 : bf16
    %1 = vector.broadcast %cst : bf16 to vector<2x64x16xbf16>
    %2 = arith.mulf %0, %1 : vector<2x64x16xbf16>
    %c0_2 = arith.constant 0 : index
    %c0_3 = arith.constant 0 : index
    %c0_4 = arith.constant 0 : index
    %3 = vector.load %arg3[%c0_2, %c0_3, %c0_4] : memref<2x128x16xbf16, #tpu.memory_space<vmem>>, vector<2x128x16xbf16>
    %c0_5 = arith.constant 0 : index
    %c0_6 = arith.constant 0 : index
    %c0_7 = arith.constant 0 : index
    %4 = vector.load %arg4[%c0_5, %c0_6, %c0_7] : memref<2x128x16xbf16, #tpu.memory_space<vmem>>, vector<2x128x16xbf16>
    %cst_8 = arith.constant dense<0.000000e+00> : vector<2x64x128xf32>
    %5 = tpu.matmul %2, %3, %cst_8 {dimension_numbers = #tpu.dot_dimension_numbers<[2], [2], [1], [1], [0, 0, 0, 1, 1, 1], [0], [0]>} : vector<2x64x16xbf16>, vector<2x128x16xbf16>, vector<2x64x128xf32> -> vector<2x64x128xf32>
    %6 = tpu.iota {dimensions = array<i32: 2>} : vector<2x64x128xi32>
    %c12_i32 = arith.constant 12 : i32
    %7 = vector.broadcast %c12_i32 : i32 to vector<2x64x128xi32>
    %8 = arith.cmpi slt, %6, %7 : vector<2x64x128xi32>
    %cst_9 = arith.constant -1.000000e+30 : f32
    %9 = vector.broadcast %cst_9 : f32 to vector<2x64x128xf32>
    %10 = arith.select %8, %5, %9 : vector<2x64x128xi1>, vector<2x64x128xf32>
    %cst_10 = arith.constant dense<0xFF800000> : vector<2x64xf32>
    %11 = vector.multi_reduction <maximumf>, %10, %cst_10 [2] : vector<2x64x128xf32> to vector<2x64xf32>
    %12 = vector.shape_cast %11 : vector<2x64xf32> to vector<2x64x1xf32>
    %13 = vector.broadcast %12 : vector<2x64x1xf32> to vector<2x64x128xf32>
    %14 = arith.subf %10, %13 : vector<2x64x128xf32>
    %15 = math.exp %14 : vector<2x64x128xf32>
    %cst_11 = arith.constant dense<0.000000e+00> : vector<2x64xf32>
    %16 = vector.multi_reduction <add>, %15, %cst_11 [2] : vector<2x64x128xf32> to vector<2x64xf32>
    %17 = vector.shape_cast %16 : vector<2x64xf32> to vector<2x64x1xf32>
    %18 = arith.truncf %15 : vector<2x64x128xf32> to vector<2x64x128xbf16>
    %cst_12 = arith.constant dense<0.000000e+00> : vector<2x64x16xf32>
    %19 = tpu.matmul %18, %4, %cst_12 {dimension_numbers = #tpu.dot_dimension_numbers<[2], [1], [1], [2], [0, 0, 0, 1, 1, 2], [0], [0]>} : vector<2x64x128xbf16>, vector<2x128x16xbf16>, vector<2x64x16xf32> -> vector<2x64x16xf32>
    %20 = tpu.reciprocal %17 {approx = true} : vector<2x64x1xf32> -> vector<2x64x1xf32>
    %21 = vector.broadcast %20 : vector<2x64x1xf32> to vector<2x64x16xf32>
    %22 = arith.mulf %19, %21 : vector<2x64x16xf32>
    %c0_13 = arith.constant 0 : index
    %c0_14 = arith.constant 0 : index
    %c0_15 = arith.constant 0 : index
    %23 = vector.load %arg5[%c0_13, %c0_14, %c0_15] : memref<2x64x16xf32, #tpu.memory_space<vmem>>, vector<2x64x16xf32>
    tpu.vector_store %arg5[%c0_13, %c0_14, %c0_15], %22 {strides = array<i32>} : memref<2x64x16xf32, #tpu.memory_space<vmem>>, vector<2x64x16xf32>,
    return
  }
  func.func @transform_0(%arg0: i32, %arg1: i32) -> (i32, i32, i32) {
    %c0_i32 = arith.constant 0 : i32
    %c0_i32_0 = arith.constant 0 : i32
    return %arg0, %arg1, %c0_i32 : i32, i32, i32
  }
  func.func @transform_1(%arg0: i32, %arg1: i32) -> (i32, i32, i32) {
    %c0_i32 = arith.constant 0 : i32
    %c0_i32_0 = arith.constant 0 : i32
    %c0_i32_1 = arith.constant 0 : i32
    return %arg0, %c0_i32, %c0_i32_0 : i32, i32, i32
  }
  func.func @transform_2(%arg0: i32, %arg1: i32) -> (i32, i32, i32) {
    %c0_i32 = arith.constant 0 : i32
    %c0_i32_0 = arith.constant 0 : i32
    %c0_i32_1 = arith.constant 0 : i32
    return %arg0, %c0_i32, %c0_i32_0 : i32, i32, i32
  }
  func.func @transform_3(%arg0: i32, %arg1: i32) -> (i32, i32, i32) {
    %c0_i32 = arith.constant 0 : i32
    %c0_i32_0 = arith.constant 0 : i32
    return %arg0, %arg1, %c0_i32 : i32, i32, i32
  }
}

</mosaic_0001>

<llo_original>
// kernel: spatial_transformer_forward.2
$region0: #{spatial_transformer_forward.2}
  #allocation0 [shape = 'u32[]', space=smem, size = 0x4, offset = 0x4, fixed_abs, tag = 'smem constant byte address 0x4 - core index']
  #allocation1 [shape = 'u32[144,128]{1,0:T(1,128)}', space=vmem, size = 0x12000, scoped, tag = 'internal scratch']
  %s0 = inlined_call_operand.vmem [shape: bf16[4,64,16], index: 0, kind: input, shape index: {}]
  %s1 = inlined_call_operand.vmem [shape: bf16[4,128,16], index: 1, kind: input, shape index: {}]
  %s2 = inlined_call_operand.vmem [shape: bf16[4,128,16], index: 2, kind: input, shape index: {}]
  %s3 = inlined_call_operand.vmem [shape: f32[4,64,16], index: 3, kind: output, shape index: {}]
  %s4 = sld [smem:[#allocation0]]
  $region45: #{spatial_transformer_forward.2} parent=0
    _
  %s6 = ssub.s32 1, %s4
  %s7 = scalar_select 0, %s6, %s4
  loop: start=0, step=1, limit=4
  $region2: #{spatial_transformer_forward.2} parent=0 // loop_pre_header
    _
  $region3: #{spatial_transformer_forward.2} parent=0 // loop_header
    %s9 = sphi 0, %s13
    %p10 = scmp.ge.s32.totalorder %s9, 4
    %s16 = sphi 0, %s28
    %s17 = sphi 0, %s24
    %s18 = sphi 0, %s16
    %s19 = sphi 0, %s17
    %s20 = sphi 0, %s18
    %s21 = sphi 0, %s19
    %s33 = sphi 0, %s35
    %s36 = sphi 0, %s33
    %s37 = sphi 0, %s36
    %s53 = sphi 0, %s37
    %s59 = sphi 0, %s61
    %s62 = sphi 0, %s59
    %s63 = sphi 0, %s62
    %s79 = sphi 0, %s63
    %s85 = sphi 0, %s87
    %s88 = sphi 0, %s85
    %s89 = sphi 0, %s88
    %s105 = sphi 0, %s89
    %s113 = sphi 0, %s115
    %s116 = sphi 0, %s113
    %s117 = sphi 0, %s116
    %s133 = sphi 0, %s117
  $region4: #{spatial_transformer_forward.2} parent=0 // loop_header_branch
    %12 = sbr.rel (%p10) target = $region8
  $region5: #{spatial_transformer_forward.2} parent=0 // loop_body
    %s14 = ssub.s32 %s9, 1
    %s15 = ssub.s32 %s9, 2
    %s22 = sadd.s32 1, %s17
    %p23 = scmp.ge.s32.totalorder %s22, 1
    %s24 = scalar_select %p23, 0, %s22
    %s25 = sadd.s32 1, %s16
    %s26 = scalar_select %p23, %s25, %s16
    %p27 = scmp.ge.s32.totalorder %s26, 2
    %s28 = scalar_select %p27, 0, %s26
    %s29 = ssub.s32 %s16, %s28
    %s30 = ssub.s32 %s17, %s24
    %s31 = sor.u32 %s29, %s30
    %p32 = scmp.eq.s32.totalorder %s31, 0
    %s34 = sadd.s32 %s33, 1
    %s35 = scalar_select %p32, %s33, %s34
    %p38 = pneg %p32
    %p39 = scmp.eq.s32.totalorder %s9, 1
    %p40 = por %p38, %p39
    %p41 = scmp.ne.s32.totalorder %s33, %s36
    %p42 = scmp.eq.s32.totalorder %s9, 0
    %p43 = por %p41, %p42
    %p44 = scmp.ne.s32.totalorder %s33, %s36
    %p45 = scmp.eq.s32.totalorder %s14, 1
    %p46 = por %p44, %p45
    %p47 = scmp.ne.s32.totalorder %s36, %s37
    %p48 = scmp.eq.s32.totalorder %s14, 0
    %p49 = por %p47, %p48
    %p50 = scmp.ne.s32.totalorder %s36, %s37
    %p51 = scmp.eq.s32.totalorder %s15, 1
    %p52 = por %p50, %p51
    %p54 = scmp.ne.s32.totalorder %s37, %s53
    %p55 = scmp.eq.s32.totalorder %s15, 0
    %p56 = por %p54, %p55
    %s57 = ssub.s32 %s16, %s28
    %p58 = scmp.eq.s32.totalorder %s57, 0
    %s60 = sadd.s32 %s59, 1
    %s61 = scalar_select %p58, %s59, %s60
    %p64 = pneg %p58
    %p65 = scmp.eq.s32.totalorder %s9, 1
    %p66 = por %p64, %p65
    %p67 = scmp.ne.s32.totalorder %s59, %s62
    %p68 = scmp.eq.s32.totalorder %s9, 0
    %p69 = por %p67, %p68
    %p70 = scmp.ne.s32.totalorder %s59, %s62
    %p71 = scmp.eq.s32.totalorder %s14, 1
    %p72 = por %p70, %p71
    %p73 = scmp.ne.s32.totalorder %s62, %s63
    %p74 = scmp.eq.s32.totalorder %s14, 0
    %p75 = por %p73, %p74
    %p76 = scmp.ne.s32.totalorder %s62, %s63
    %p77 = scmp.eq.s32.totalorder %s15, 1
    %p78 = por %p76, %p77
    %p80 = scmp.ne.s32.totalorder %s63, %s79
    %p81 = scmp.eq.s32.totalorder %s15, 0
    %p82 = por %p80, %p81
    %s83 = ssub.s32 %s16, %s28
    %p84 = scmp.eq.s32.totalorder %s83, 0
    %s86 = sadd.s32 %s85, 1
    %s87 = scalar_select %p84, %s85, %s86
    %p90 = pneg %p84
    %p91 = scmp.eq.s32.totalorder %s9, 1
    %p92 = por %p90, %p91
    %p93 = scmp.ne.s32.totalorder %s85, %s88
    %p94 = scmp.eq.s32.totalorder %s9, 0
    %p95 = por %p93, %p94
    %p96 = scmp.ne.s32.totalorder %s85, %s88
    %p97 = scmp.eq.s32.totalorder %s14, 1
    %p98 = por %p96, %p97
    %p99 = scmp.ne.s32.totalorder %s88, %s89
    %p100 = scmp.eq.s32.totalorder %s14, 0
    %p101 = por %p99, %p100
    %p102 = scmp.ne.s32.totalorder %s88, %s89
    %p103 = scmp.eq.s32.totalorder %s15, 1
    %p104 = por %p102, %p103
    %p106 = scmp.ne.s32.totalorder %s89, %s105
    %p107 = scmp.eq.s32.totalorder %s15, 0
    %p108 = por %p106, %p107
    %s109 = ssub.s32 %s16, %s28
    %s110 = ssub.s32 %s17, %s24
    %s111 = sor.u32 %s109, %s110
    %p112 = scmp.eq.s32.totalorder %s111, 0
    %s114 = sadd.s32 %s113, 1
    %s115 = scalar_select %p112, %s113, %s114
    %p118 = pneg %p112
    %p119 = scmp.eq.s32.totalorder %s9, 1
    %p120 = por %p118, %p119
    %p121 = scmp.ne.s32.totalorder %s113, %s116
    %p122 = scmp.eq.s32.totalorder %s9, 0
    %p123 = por %p121, %p122
    %p124 = scmp.ne.s32.totalorder %s113, %s116
    %p125 = scmp.eq.s32.totalorder %s14, 1
    %p126 = por %p124, %p125
    %p127 = scmp.ne.s32.totalorder %s116, %s117
    %p128 = scmp.eq.s32.totalorder %s14, 0
    %p129 = por %p127, %p128
    %p130 = scmp.ne.s32.totalorder %s116, %s117
    %p131 = scmp.eq.s32.totalorder %s15, 1
    %p132 = por %p130, %p131
    %p134 = scmp.ne.s32.totalorder %s117, %s133
    %p135 = scmp.eq.s32.totalorder %s15, 0
    %p136 = por %p134, %p135
    %p137 = scmp.le.s32.totalorder 1, %s9
    %p138 = scmp.lt.s32.totalorder %s9, 3
    %p139 = pnand %p137, %p138
    %p140 = pneg %p139
    // Predicated region
    $region9: #{spatial_transformer_forward.2} parent=5 // pred_check
      _
    $region10: #{spatial_transformer_forward.2} parent=5 // pred_check_branch
      %142 = sbr.rel (%p139) target = $region12
    $region11: #{spatial_transformer_forward.2} parent=5 // pred_region
      %s143 = ssub.s32 %s9, 1
    $region12: #{spatial_transformer_forward.2} parent=5 // pred_fallthru
      _
    %p144 = scmp.lt.s32.totalorder %s9, 2
    // Predicated region
    $region13: #{spatial_transformer_forward.2} parent=5 // pred_check
      %p145 = pneg %p144
    $region14: #{spatial_transformer_forward.2} parent=5 // pred_check_branch
      %147 = sbr.rel (%p145) target = $region16
    $region15: #{spatial_transformer_forward.2} parent=5 // pred_region
      // Predicated region
      $region17: #{spatial_transformer_forward.2} parent=15 // pred_check
        %p148 = pneg %p43
      $region18: #{spatial_transformer_forward.2} parent=15 // pred_check_branch
        %150 = sbr.rel (%p148) target = $region20
      $region19: #{spatial_transformer_forward.2} parent=15 // pred_region
        %s151 = smul.u32 2, %s16
        %s152 = smul.u32 8, %s17
        %p153 = scmp.lt.s32.totalorder %s151, 3
        %s154 = scalar_select %p153, %s151, 3
        %p155 = scmp.lt.s32.totalorder %s152, 7
        %s156 = scalar_select %p155, %s152, 7
        %s157 = smul.addr %s154, 8
        %s158 = sadd.s32 %s156, %s157
        %s159 = smul.addr %s158, 4
        %s160 = scalar_lea.vmem %s0, %s159
        %s161 = smul.u32 2, %s16
        %s162 = smul.u32 8, %s17
      $region20: #{spatial_transformer_forward.2} parent=15 // pred_fallthru
        _
      // Predicated region
      $region21: #{spatial_transformer_forward.2} parent=15 // pred_check
        %p163 = pneg %p69
      $region22: #{spatial_transformer_forward.2} parent=15 // pred_check_branch
        %165 = sbr.rel (%p163) target = $region24
      $region23: #{spatial_transformer_forward.2} parent=15 // pred_region
        %s166 = smul.u32 2, %s16
        %p167 = scmp.lt.s32.totalorder %s166, 3
        %s168 = scalar_select %p167, %s166, 3
        %s169 = smul.addr %s168, 16
        %s170 = smul.addr %s169, 4
        %s171 = scalar_lea.vmem %s1, %s170
        %s172 = smul.u32 2, %s16
      $region24: #{spatial_transformer_forward.2} parent=15 // pred_fallthru
        _
      // Predicated region
      $region25: #{spatial_transformer_forward.2} parent=15 // pred_check
        %p173 = pneg %p95
      $region26: #{spatial_transformer_forward.2} parent=15 // pred_check_branch
        %175 = sbr.rel (%p173) target = $region28
      $region27: #{spatial_transformer_forward.2} parent=15 // pred_region
        %s176 = smul.u32 2, %s16
        %p177 = scmp.lt.s32.totalorder %s176, 3
        %s178 = scalar_select %p177, %s176, 3
        %s179 = smul.addr %s178, 16
        %s180 = smul.addr %s179, 4
        %s181 = scalar_lea.vmem %s2, %s180
        %s182 = smul.u32 2, %s16
      $region28: #{spatial_transformer_forward.2} parent=15 // pred_fallthru
        _
    $region16: #{spatial_transformer_forward.2} parent=5 // pred_fallthru
      _
    %p183 = scmp.le.s32.totalorder 1, %s9
    %p184 = scmp.lt.s32.totalorder %s9, 3
    %p185 = pnand %p183, %p184
    %p186 = pneg %p185
    // Predicated region
    $region29: #{spatial_transformer_forward.2} parent=5 // pred_check
      _
    $region30: #{spatial_transformer_forward.2} parent=5 // pred_check_branch
      %188 = sbr.rel (%p185) target = $region32
    $region31: #{spatial_transformer_forward.2} parent=5 // pred_region
      %s189 = ssub.s32 %s9, 1
      %s190 = smul.u32 2, %s18
      %s191 = smul.u32 8, %s19
      %p192 = scmp.lt.s32.totalorder %s190, 3
      %s193 = scalar_select %p192, %s190, 3
      %p194 = scmp.lt.s32.totalorder %s191, 7
      %s195 = scalar_select %p194, %s191, 7
      %s196 = smul.addr %s193, 8
      %s197 = sadd.s32 %s195, %s196
      %s198 = smul.addr %s197, 4
      %s199 = scalar_lea.vmem %s0, %s198
      %p200 = pneg %p49
      %p201 = pneg %p46
      %s202 = smul.u32 2, %s18
      %p203 = scmp.lt.s32.totalorder %s202, 3
      %s204 = scalar_select %p203, %s202, 3
      %s205 = smul.addr %s204, 16
      %s206 = smul.addr %s205, 4
      %s207 = scalar_lea.vmem %s1, %s206
      %p208 = pneg %p75
      %p209 = pneg %p72
      %s210 = smul.u32 2, %s18
      %p211 = scmp.lt.s32.totalorder %s210, 3
      %s212 = scalar_select %p211, %s210, 3
      %s213 = smul.addr %s212, 16
      %s214 = smul.addr %s213, 4
      %s215 = scalar_lea.vmem %s2, %s214
      %p216 = pneg %p101
      %p217 = pneg %p98
      %p218 = pneg %p129
      %p219 = pneg %p126
      %s220 = smul.u32 2, %s18
      %s221 = smul.u32 8, %s19
      %p222 = scmp.lt.s32.totalorder %s220, 3
      %s223 = scalar_select %p222, %s220, 3
      %p224 = scmp.lt.s32.totalorder %s221, 7
      %s225 = scalar_select %p224, %s221, 7
      %s226 = smul.addr %s223, 8
      %s227 = sadd.s32 %s225, %s226
      %s228 = smul.addr %s227, 8
      %s229 = scalar_lea.vmem %s3, %s228
      %s230 = smul.u32 2, %s18
      %s231 = smul.u32 8, %s19
      %p232 = scmp.lt.s32.totalorder %s230, 3
      %s233 = scalar_select %p232, %s230, 3
      %p234 = scmp.lt.s32.totalorder %s231, 7
      %s235 = scalar_select %p234, %s231, 7
      %s236 = smul.addr %s233, 8
      %s237 = sadd.s32 %s235, %s236
      %s238 = smul.addr %s237, 4
      %s239 = scalar_lea.vmem %s0, %s238
      %s240 = smul.u32 2, %s18
      %s241 = smul.u32 8, %s19
      %s242 = smul.u32 2, %s18
      %p243 = scmp.lt.s32.totalorder %s242, 3
      %s244 = scalar_select %p243, %s242, 3
      %s245 = smul.addr %s244, 16
      %s246 = smul.addr %s245, 4
      %s247 = scalar_lea.vmem %s1, %s246
      %s248 = smul.u32 2, %s18
      %s249 = smul.u32 2, %s18
      %p250 = scmp.lt.s32.totalorder %s249, 3
      %s251 = scalar_select %p250, %s249, 3
      %s252 = smul.addr %s251, 16
      %s253 = smul.addr %s252, 4
      %s254 = scalar_lea.vmem %s2, %s253
      %s255 = smul.u32 2, %s18
      %s256 = smul.u32 2, %s18
      %s257 = smul.u32 8, %s19
      %p258 = scmp.lt.s32.totalorder %s256, 3
      %s259 = scalar_select %p258, %s256, 3
      %p260 = scmp.lt.s32.totalorder %s257, 7
      %s261 = scalar_select %p260, %s257, 7
      %s262 = smul.addr %s259, 8
      %s263 = sadd.s32 %s261, %s262
      %s264 = smul.addr %s263, 8
      %s265 = scalar_lea.vmem %s3, %s264
      %s266 = smul.u32 2, %s18
      %s267 = smul.u32 8, %s19
      %v270 = vld [vmem:[%s239] sm:$0xf]
      %v271 = vld [vmem:[%s239 + $0x4] sm:$0xf]
      %v272 = vld [vmem:[%s239 + $0x8] sm:$0xf]
      %v273 = vld [vmem:[%s239 + $0xc] sm:$0xf]
      %v274 = vld [vmem:[%s239 + $0x10] sm:$0xf]
      %v275 = vld [vmem:[%s239 + $0x14] sm:$0xf]
      %v276 = vld [vmem:[%s239 + $0x18] sm:$0xf]
      %v277 = vld [vmem:[%s239 + $0x1c] sm:$0xf]
      %v278 = vld [vmem:[%s239 + $0x20] sm:$0xf]
      %v279 = vld [vmem:[%s239 + $0x24] sm:$0xf]
      %v280 = vld [vmem:[%s239 + $0x28] sm:$0xf]
      %v281 = vld [vmem:[%s239 + $0x2c] sm:$0xf]
      %v282 = vld [vmem:[%s239 + $0x30] sm:$0xf]
      %v283 = vld [vmem:[%s239 + $0x34] sm:$0xf]
      %v284 = vld [vmem:[%s239 + $0x38] sm:$0xf]
      %v285 = vld [vmem:[%s239 + $0x3c] sm:$0xf]
      %v286 = vmul.bf16 %v270, 1048592000
      %v287 = vmul.bf16 %v271, 1048592000
      %v288 = vmul.bf16 %v272, 1048592000
      %v289 = vmul.bf16 %v273, 1048592000
      %v290 = vmul.bf16 %v274, 1048592000
      %v291 = vmul.bf16 %v275, 1048592000
      %v292 = vmul.bf16 %v276, 1048592000
      %v293 = vmul.bf16 %v277, 1048592000
      %v294 = vmul.bf16 %v278, 1048592000
      %v295 = vmul.bf16 %v279, 1048592000
      %v296 = vmul.bf16 %v280, 1048592000
      %v297 = vmul.bf16 %v281, 1048592000
      %v298 = vmul.bf16 %v282, 1048592000
      %v299 = vmul.bf16 %v283, 1048592000
      %v300 = vmul.bf16 %v284, 1048592000
      %v301 = vmul.bf16 %v285, 1048592000
      %v302 = vld [vmem:[%s247] sm:$0xf]
      %v303 = vld [vmem:[%s247 + $0x4] sm:$0xf]
      %v304 = vld [vmem:[%s247 + $0x8] sm:$0xf]
      %v305 = vld [vmem:[%s247 + $0xc] sm:$0xf]
      %v306 = vld [vmem:[%s247 + $0x10] sm:$0xf]
      %v307 = vld [vmem:[%s247 + $0x14] sm:$0xf]
      %v308 = vld [vmem:[%s247 + $0x18] sm:$0xf]
      %v309 = vld [vmem:[%s247 + $0x1c] sm:$0xf]
      %v310 = vld [vmem:[%s247 + $0x20] sm:$0xf]
      %v311 = vld [vmem:[%s247 + $0x24] sm:$0xf]
      %v312 = vld [vmem:[%s247 + $0x28] sm:$0xf]
      %v313 = vld [vmem:[%s247 + $0x2c] sm:$0xf]
      %v314 = vld [vmem:[%s247 + $0x30] sm:$0xf]
      %v315 = vld [vmem:[%s247 + $0x34] sm:$0xf]
      %v316 = vld [vmem:[%s247 + $0x38] sm:$0xf]
      %v317 = vld [vmem:[%s247 + $0x3c] sm:$0xf]
      %v318 = vld [vmem:[%s247 + $0x40] sm:$0xf]
      %v319 = vld [vmem:[%s247 + $0x44] sm:$0xf]
      %v320 = vld [vmem:[%s247 + $0x48] sm:$0xf]
      %v321 = vld [vmem:[%s247 + $0x4c] sm:$0xf]
      %v322 = vld [vmem:[%s247 + $0x50] sm:$0xf]
      %v323 = vld [vmem:[%s247 + $0x54] sm:$0xf]
      %v324 = vld [vmem:[%s247 + $0x58] sm:$0xf]
      %v325 = vld [vmem:[%s247 + $0x5c] sm:$0xf]
      %v326 = vld [vmem:[%s247 + $0x60] sm:$0xf]
      %v327 = vld [vmem:[%s247 + $0x64] sm:$0xf]
      %v328 = vld [vmem:[%s247 + $0x68] sm:$0xf]
      %v329 = vld [vmem:[%s247 + $0x6c] sm:$0xf]
      %v330 = vld [vmem:[%s247 + $0x70] sm:$0xf]
      %v331 = vld [vmem:[%s247 + $0x74] sm:$0xf]
      %v332 = vld [vmem:[%s247 + $0x78] sm:$0xf]
      %v333 = vld [vmem:[%s247 + $0x7c] sm:$0xf]
      %v334 = vld [vmem:[%s254] sm:$0xf]
      %v335 = vld [vmem:[%s254 + $0x4] sm:$0xf]
      %v336 = vld [vmem:[%s254 + $0x8] sm:$0xf]
      %v337 = vld [vmem:[%s254 + $0xc] sm:$0xf]
      %v338 = vld [vmem:[%s254 + $0x10] sm:$0xf]
      %v339 = vld [vmem:[%s254 + $0x14] sm:$0xf]
      %v340 = vld [vmem:[%s254 + $0x18] sm:$0xf]
      %v341 = vld [vmem:[%s254 + $0x1c] sm:$0xf]
      %v342 = vld [vmem:[%s254 + $0x20] sm:$0xf]
      %v343 = vld [vmem:[%s254 + $0x24] sm:$0xf]
      %v344 = vld [vmem:[%s254 + $0x28] sm:$0xf]
      %v345 = vld [vmem:[%s254 + $0x2c] sm:$0xf]
      %v346 = vld [vmem:[%s254 + $0x30] sm:$0xf]
      %v347 = vld [vmem:[%s254 + $0x34] sm:$0xf]
      %v348 = vld [vmem:[%s254 + $0x38] sm:$0xf]
      %v349 = vld [vmem:[%s254 + $0x3c] sm:$0xf]
      %v350 = vld [vmem:[%s254 + $0x40] sm:$0xf]
      %v351 = vld [vmem:[%s254 + $0x44] sm:$0xf]
      %v352 = vld [vmem:[%s254 + $0x48] sm:$0xf]
      %v353 = vld [vmem:[%s254 + $0x4c] sm:$0xf]
      %v354 = vld [vmem:[%s254 + $0x50] sm:$0xf]
      %v355 = vld [vmem:[%s254 + $0x54] sm:$0xf]
      %v356 = vld [vmem:[%s254 + $0x58] sm:$0xf]
      %v357 = vld [vmem:[%s254 + $0x5c] sm:$0xf]
      %v358 = vld [vmem:[%s254 + $0x60] sm:$0xf]
      %v359 = vld [vmem:[%s254 + $0x64] sm:$0xf]
      %v360 = vld [vmem:[%s254 + $0x68] sm:$0xf]
      %v361 = vld [vmem:[%s254 + $0x6c] sm:$0xf]
      %v362 = vld [vmem:[%s254 + $0x70] sm:$0xf]
      %v363 = vld [vmem:[%s254 + $0x74] sm:$0xf]
      %v364 = vld [vmem:[%s254 + $0x78] sm:$0xf]
      %v365 = vld [vmem:[%s254 + $0x7c] sm:$0xf]
      %v374 = vunpack.c.l.b16 %v286
      %v375 = vunpack.c.l.b16 %v287
      %v376 = vunpack.c.l.b16 %v288
      %v377 = vunpack.c.l.b16 %v289
      %v378 = vunpack.c.l.b16 %v290
      %v379 = vunpack.c.l.b16 %v291
      %v380 = vunpack.c.l.b16 %v292
      %v381 = vunpack.c.l.b16 %v293
      %v382 = vpack.c.b16 %v375, %v374
      %v383 = vpack.c.b16 %v377, %v376
      %v384 = vpack.c.b16 %v379, %v378
      %v385 = vpack.c.b16 %v381, %v380
      %v402 = vunpack.c.l.b16 %v302
      %v403 = vunpack.c.l.b16 %v303
      %v404 = vunpack.c.l.b16 %v304
      %v405 = vunpack.c.l.b16 %v305
      %v406 = vunpack.c.l.b16 %v306
      %v407 = vunpack.c.l.b16 %v307
      %v408 = vunpack.c.l.b16 %v308
      %v409 = vunpack.c.l.b16 %v309
      %v410 = vunpack.c.l.b16 %v310
      %v411 = vunpack.c.l.b16 %v311
      %v412 = vunpack.c.l.b16 %v312
      %v413 = vunpack.c.l.b16 %v313
      %v414 = vunpack.c.l.b16 %v314
      %v415 = vunpack.c.l.b16 %v315
      %v416 = vunpack.c.l.b16 %v316
      %v417 = vunpack.c.l.b16 %v317
      %v418 = vpack.c.b16 %v403, %v402
      %v419 = vpack.c.b16 %v405, %v404
      %v420 = vpack.c.b16 %v407, %v406
      %v421 = vpack.c.b16 %v409, %v408
      %v422 = vpack.c.b16 %v411, %v410
      %v423 = vpack.c.b16 %v413, %v412
      %v424 = vpack.c.b16 %v415, %v414
      %v425 = vpack.c.b16 %v417, %v416
      %vm426 = vcmask 130048
      %v428 = vsel %vm426, %v382, 0
      %v431 = vsel %vm426, %v383, 0
      %v434 = vsel %vm426, %v384, 0
      %v437 = vsel %vm426, %v385, 0
      %v440 = vsel %vm426, %v418, 0
      %v443 = vsel %vm426, %v419, 0
      %v446 = vsel %vm426, %v420, 0
      %v449 = vsel %vm426, %v421, 0
      %v452 = vsel %vm426, %v422, 0
      %v455 = vsel %vm426, %v423, 0
      %v458 = vsel %vm426, %v424, 0
      %v461 = vsel %vm426, %v425, 0
      %463 = vmatprep.subr.bf16.mxu0 0
      %464 = vmatpush1.bf16.xpose.msra.mxu0 %v440
      %465 = vmatprep.subr.bf16.mxu0 0
      %466 = vmatpush1.bf16.xpose.msra.mxu0 %v443
      %467 = vmatprep.subr.bf16.mxu0 0
      %468 = vmatpush1.bf16.xpose.msra.mxu0 %v446
      %469 = vmatprep.subr.bf16.mxu0 0
      %470 = vmatpush1.bf16.xpose.msra.mxu0 %v449
      %471 = vmatprep.subr.bf16.mxu0 0
      %472 = vmatpush1.bf16.xpose.msra.mxu0 %v452
      %473 = vmatprep.subr.bf16.mxu0 0
      %474 = vmatpush1.bf16.xpose.msra.mxu0 %v455
      %475 = vmatprep.subr.bf16.mxu0 0
      %476 = vmatpush1.bf16.xpose.msra.mxu0 %v458
      %477 = vmatprep.subr.bf16.mxu0 0
      %478 = vmatpush1.bf16.xpose.msra.mxu0 %v461
      %479 = vmatprep.subr.bf16.mxu0 0
      %480 = vmatpush1.bf16.xpose.msra.mxu0 0
      %481 = vmatprep.subr.bf16.mxu0 0
      %482 = vmatpush1.bf16.xpose.msra.mxu0 0
      %483 = vmatprep.subr.bf16.mxu0 0
      %484 = vmatpush1.bf16.xpose.msra.mxu0 0
      %485 = vmatprep.subr.bf16.mxu0 0
      %486 = vmatpush1.bf16.xpose.msra.mxu0 0
      %487 = vmatprep.subr.bf16.mxu0 0
      %488 = vmatpush1.bf16.xpose.msra.mxu0 0
      %489 = vmatprep.subr.bf16.mxu0 0
      %490 = vmatpush1.bf16.xpose.msra.mxu0 0
      %491 = vmatprep.subr.bf16.mxu0 0
      %492 = vmatpush1.bf16.xpose.msra.mxu0 0
      %493 = vmatprep.subr.bf16.mxu0 0
      %494 = vmatpush1.bf16.xpose.msra.mxu0 0
      %495 = vmatprep.mubr.bf16.mxu0 0
      %496 = vmatmul.mubr.bf16.gmra.mrb[0].mxu0 %v428
      %v497 = vpop.f32.mrb[0].mxu0
      %v498 = vadd.f32 0.0, %v497
      %v499 = vpop.f32.mrb[0].mxu0
      %v500 = vpop.f32.mrb[0].mxu0
      %v501 = vadd.f32 0.0, %v500
      %v502 = vpop.f32.mrb[0].mxu0
      %503 = vmatprep.mubr.bf16.mxu0 0
      %504 = vmatmul.mubr.bf16.gmra.mrb[0].mxu0 %v431
      %v505 = vpop.f32.mrb[0].mxu0
      %v506 = vadd.f32 0.0, %v505
      %v507 = vpop.f32.mrb[0].mxu0
      %v508 = vpop.f32.mrb[0].mxu0
      %v509 = vadd.f32 0.0, %v508
      %v510 = vpop.f32.mrb[0].mxu0
      %511 = vmatprep.mubr.bf16.mxu0 0
      %512 = vmatmul.mubr.bf16.gmra.mrb[0].mxu0 %v434
      %v513 = vpop.f32.mrb[0].mxu0
      %v514 = vadd.f32 0.0, %v513
      %v515 = vpop.f32.mrb[0].mxu0
      %v516 = vpop.f32.mrb[0].mxu0
      %v517 = vadd.f32 0.0, %v516
      %v518 = vpop.f32.mrb[0].mxu0
      %519 = vmatprep.mubr.bf16.mxu0 0
      %520 = vmatmul.mubr.bf16.gmra.mrb[0].mxu0 %v437
      %v521 = vpop.f32.mrb[0].mxu0
      %v522 = vadd.f32 0.0, %v521
      %v523 = vpop.f32.mrb[0].mxu0
      %v524 = vpop.f32.mrb[0].mxu0
      %v525 = vadd.f32 0.0, %v524
      %v526 = vpop.f32.mrb[0].mxu0
      %527 = vdwg.mxu0
      %v536 = vunpack.c.l.b16 %v294
      %v537 = vunpack.c.l.b16 %v295
      %v538 = vunpack.c.l.b16 %v296
      %v539 = vunpack.c.l.b16 %v297
      %v540 = vunpack.c.l.b16 %v298
      %v541 = vunpack.c.l.b16 %v299
      %v542 = vunpack.c.l.b16 %v300
      %v543 = vunpack.c.l.b16 %v301
      %v544 = vpack.c.b16 %v537, %v536
      %v545 = vpack.c.b16 %v539, %v538
      %v546 = vpack.c.b16 %v541, %v540
      %v547 = vpack.c.b16 %v543, %v542
      %v564 = vunpack.c.l.b16 %v318
      %v565 = vunpack.c.l.b16 %v319
      %v566 = vunpack.c.l.b16 %v320
      %v567 = vunpack.c.l.b16 %v321
      %v568 = vunpack.c.l.b16 %v322
      %v569 = vunpack.c.l.b16 %v323
      %v570 = vunpack.c.l.b16 %v324
      %v571 = vunpack.c.l.b16 %v325
      %v572 = vunpack.c.l.b16 %v326
      %v573 = vunpack.c.l.b16 %v327
      %v574 = vunpack.c.l.b16 %v328
      %v575 = vunpack.c.l.b16 %v329
      %v576 = vunpack.c.l.b16 %v330
      %v577 = vunpack.c.l.b16 %v331
      %v578 = vunpack.c.l.b16 %v332
      %v579 = vunpack.c.l.b16 %v333
      %v580 = vpack.c.b16 %v565, %v564
      %v581 = vpack.c.b16 %v567, %v566
      %v582 = vpack.c.b16 %v569, %v568
      %v583 = vpack.c.b16 %v571, %v570
      %v584 = vpack.c.b16 %v573, %v572
      %v585 = vpack.c.b16 %v575, %v574
      %v586 = vpack.c.b16 %v577, %v576
      %v587 = vpack.c.b16 %v579, %v578
      %v589 = vsel %vm426, %v544, 0
      %v592 = vsel %vm426, %v545, 0
      %v595 = vsel %vm426, %v546, 0
      %v598 = vsel %vm426, %v547, 0
      %v601 = vsel %vm426, %v580, 0
      %v604 = vsel %vm426, %v581, 0
      %v607 = vsel %vm426, %v582, 0
      %v610 = vsel %vm426, %v583, 0
      %v613 = vsel %vm426, %v584, 0
      %v616 = vsel %vm426, %v585, 0
      %v619 = vsel %vm426, %v586, 0
      %v622 = vsel %vm426, %v587, 0
      %624 = vmatprep.subr.bf16.mxu0 0
      %625 = vmatpush1.bf16.xpose.msra.mxu0 %v601
      %626 = vmatprep.subr.bf16.mxu0 0
      %627 = vmatpush1.bf16.xpose.msra.mxu0 %v604
      %628 = vmatprep.subr.bf16.mxu0 0
      %629 = vmatpush1.bf16.xpose.msra.mxu0 %v607
      %630 = vmatprep.subr.bf16.mxu0 0
      %631 = vmatpush1.bf16.xpose.msra.mxu0 %v610
      %632 = vmatprep.subr.bf16.mxu0 0
      %633 = vmatpush1.bf16.xpose.msra.mxu0 %v613
      %634 = vmatprep.subr.bf16.mxu0 0
      %635 = vmatpush1.bf16.xpose.msra.mxu0 %v616
      %636 = vmatprep.subr.bf16.mxu0 0
      %637 = vmatpush1.bf16.xpose.msra.mxu0 %v619
      %638 = vmatprep.subr.bf16.mxu0 0
      %639 = vmatpush1.bf16.xpose.msra.mxu0 %v622
      %640 = vmatprep.subr.bf16.mxu0 0
      %641 = vmatpush1.bf16.xpose.msra.mxu0 0
      %642 = vmatprep.subr.bf16.mxu0 0
      %643 = vmatpush1.bf16.xpose.msra.mxu0 0
      %644 = vmatprep.subr.bf16.mxu0 0
      %645 = vmatpush1.bf16.xpose.msra.mxu0 0
      %646 = vmatprep.subr.bf16.mxu0 0
      %647 = vmatpush1.bf16.xpose.msra.mxu0 0
      %648 = vmatprep.subr.bf16.mxu0 0
      %649 = vmatpush1.bf16.xpose.msra.mxu0 0
      %650 = vmatprep.subr.bf16.mxu0 0
      %651 = vmatpush1.bf16.xpose.msra.mxu0 0
      %652 = vmatprep.subr.bf16.mxu0 0
      %653 = vmatpush1.bf16.xpose.msra.mxu0 0
      %654 = vmatprep.subr.bf16.mxu0 0
      %655 = vmatpush1.bf16.xpose.msra.mxu0 0
      %656 = vmatprep.mubr.bf16.mxu0 0
      %657 = vmatmul.mubr.bf16.gmra.mrb[0].mxu0 %v589
      %v658 = vpop.f32.mrb[0].mxu0
      %v659 = vadd.f32 0.0, %v658
      %v660 = vpop.f32.mrb[0].mxu0
      %v661 = vpop.f32.mrb[0].mxu0
      %v662 = vadd.f32 0.0, %v661
      %v663 = vpop.f32.mrb[0].mxu0
      %664 = vmatprep.mubr.bf16.mxu0 0
      %665 = vmatmul.mubr.bf16.gmra.mrb[0].mxu0 %v592
      %v666 = vpop.f32.mrb[0].mxu0
      %v667 = vadd.f32 0.0, %v666
      %v668 = vpop.f32.mrb[0].mxu0
      %v669 = vpop.f32.mrb[0].mxu0
      %v670 = vadd.f32 0.0, %v669
      %v671 = vpop.f32.mrb[0].mxu0
      %672 = vmatprep.mubr.bf16.mxu0 0
      %673 = vmatmul.mubr.bf16.gmra.mrb[0].mxu0 %v595
      %v674 = vpop.f32.mrb[0].mxu0
      %v675 = vadd.f32 0.0, %v674
      %v676 = vpop.f32.mrb[0].mxu0
      %v677 = vpop.f32.mrb[0].mxu0
      %v678 = vadd.f32 0.0, %v677
      %v679 = vpop.f32.mrb[0].mxu0
      %680 = vmatprep.mubr.bf16.mxu0 0
      %681 = vmatmul.mubr.bf16.gmra.mrb[0].mxu0 %v598
      %v682 = vpop.f32.mrb[0].mxu0
      %v683 = vadd.f32 0.0, %v682
      %v684 = vpop.f32.mrb[0].mxu0
      %v685 = vpop.f32.mrb[0].mxu0
      %v686 = vadd.f32 0.0, %v685
      %v687 = vpop.f32.mrb[0].mxu0
      %688 = vdwg.mxu0
      %v689 = vlaneseq
      %v690 = vand.u32 %v689, 127
      %vm691 = vcmp.lt.s32.totalorder %v690, 64
      %v692 = vsel %vm691, %v498, -1e+30
      %v693 = vsel %vm691, %v501, -1e+30
      %v694 = vsel %vm691, %v506, -1e+30
      %v695 = vsel %vm691, %v509, -1e+30
      %v696 = vsel %vm691, %v514, -1e+30
      %v697 = vsel %vm691, %v517, -1e+30
      %v698 = vsel %vm691, %v522, -1e+30
      %v699 = vsel %vm691, %v525, -1e+30
      %v700 = vsel %vm691, %v659, -1e+30
      %v701 = vsel %vm691, %v662, -1e+30
      %v702 = vsel %vm691, %v667, -1e+30
      %v703 = vsel %vm691, %v670, -1e+30
      %v704 = vsel %vm691, %v675, -1e+30
      %v705 = vsel %vm691, %v678, -1e+30
      %v706 = vsel %vm691, %v683, -1e+30
      %v707 = vsel %vm691, %v686, -1e+30
      %708 = vmax.xlane.f32.xlu0 %v692
      %v709 = vpop.xlane.xlu0 %708
      %710 = vmax.xlane.f32.xlu0 %v693
      %v711 = vpop.xlane.xlu0 %710
      %712 = vmax.xlane.f32.xlu0 %v694
      %v713 = vpop.xlane.xlu0 %712
      %714 = vmax.xlane.f32.xlu0 %v695
      %v715 = vpop.xlane.xlu0 %714
      %716 = vmax.xlane.f32.xlu0 %v696
      %v717 = vpop.xlane.xlu0 %716
      %718 = vmax.xlane.f32.xlu0 %v697
      %v719 = vpop.xlane.xlu0 %718
      %720 = vmax.xlane.f32.xlu0 %v698
      %v721 = vpop.xlane.xlu0 %720
      %722 = vmax.xlane.f32.xlu0 %v699
      %v723 = vpop.xlane.xlu0 %722
      %724 = vmax.xlane.f32.xlu0 %v700
      %v725 = vpop.xlane.xlu0 %724
      %726 = vmax.xlane.f32.xlu0 %v701
      %v727 = vpop.xlane.xlu0 %726
      %728 = vmax.xlane.f32.xlu0 %v702
      %v729 = vpop.xlane.xlu0 %728
      %730 = vmax.xlane.f32.xlu0 %v703
      %v731 = vpop.xlane.xlu0 %730
      %732 = vmax.xlane.f32.xlu0 %v704
      %v733 = vpop.xlane.xlu0 %732
      %734 = vmax.xlane.f32.xlu0 %v705
      %v735 = vpop.xlane.xlu0 %734
      %736 = vmax.xlane.f32.xlu0 %v706
      %v737 = vpop.xlane.xlu0 %736
      %738 = vmax.xlane.f32.xlu0 %v707
      %v739 = vpop.xlane.xlu0 %738
      %v740 = vsub.f32 %v692, %v709
      %v741 = vsub.f32 %v693, %v711
      %v742 = vsub.f32 %v694, %v713
      %v743 = vsub.f32 %v695, %v715
      %v744 = vsub.f32 %v696, %v717
      %v745 = vsub.f32 %v697, %v719
      %v746 = vsub.f32 %v698, %v721
      %v747 = vsub.f32 %v699, %v723
      %v748 = vsub.f32 %v700, %v725
      %v749 = vsub.f32 %v701, %v727
      %v750 = vsub.f32 %v702, %v729
      %v751 = vsub.f32 %v703, %v731
      %v752 = vsub.f32 %v704, %v733
      %v753 = vsub.f32 %v705, %v735
      %v754 = vsub.f32 %v706, %v737
      %v755 = vsub.f32 %v707, %v739
      %v756 = vmul.f32 %v740, 1.442695
      %v757 = vpow.pop %v756
      %v758 = vmul.f32 %v741, 1.442695
      %v759 = vpow.pop %v758
      %v760 = vmul.f32 %v742, 1.442695
      %v761 = vpow.pop %v760
      %v762 = vmul.f32 %v743, 1.442695
      %v763 = vpow.pop %v762
      %v764 = vmul.f32 %v744, 1.442695
      %v765 = vpow.pop %v764
      %v766 = vmul.f32 %v745, 1.442695
      %v767 = vpow.pop %v766
      %v768 = vmul.f32 %v746, 1.442695
      %v769 = vpow.pop %v768
      %v770 = vmul.f32 %v747, 1.442695
      %v771 = vpow.pop %v770
      %v772 = vmul.f32 %v748, 1.442695
      %v773 = vpow.pop %v772
      %v774 = vmul.f32 %v749, 1.442695
      %v775 = vpow.pop %v774
      %v776 = vmul.f32 %v750, 1.442695
      %v777 = vpow.pop %v776
      %v778 = vmul.f32 %v751, 1.442695
      %v779 = vpow.pop %v778
      %v780 = vmul.f32 %v752, 1.442695
      %v781 = vpow.pop %v780
      %v782 = vmul.f32 %v753, 1.442695
      %v783 = vpow.pop %v782
      %v784 = vmul.f32 %v754, 1.442695
      %v785 = vpow.pop %v784
      %v786 = vmul.f32 %v755, 1.442695
      %v787 = vpow.pop %v786
      %788 = vadd.xlane.f32.xlu0 %v757
      %v789 = vpop.xlane.xlu0 %788
      %790 = vadd.xlane.f32.xlu0 %v759
      %v791 = vpop.xlane.xlu0 %790
      %792 = vadd.xlane.f32.xlu0 %v761
      %v793 = vpop.xlane.xlu0 %792
      %794 = vadd.xlane.f32.xlu0 %v763
      %v795 = vpop.xlane.xlu0 %794
      %796 = vadd.xlane.f32.xlu0 %v765
      %v797 = vpop.xlane.xlu0 %796
      %798 = vadd.xlane.f32.xlu0 %v767
      %v799 = vpop.xlane.xlu0 %798
      %800 = vadd.xlane.f32.xlu0 %v769
      %v801 = vpop.xlane.xlu0 %800
      %802 = vadd.xlane.f32.xlu0 %v771
      %v803 = vpop.xlane.xlu0 %802
      %804 = vadd.xlane.f32.xlu0 %v773
      %v805 = vpop.xlane.xlu0 %804
      %806 = vadd.xlane.f32.xlu0 %v775
      %v807 = vpop.xlane.xlu0 %806
      %808 = vadd.xlane.f32.xlu0 %v777
      %v809 = vpop.xlane.xlu0 %808
      %810 = vadd.xlane.f32.xlu0 %v779
      %v811 = vpop.xlane.xlu0 %810
      %812 = vadd.xlane.f32.xlu0 %v781
      %v813 = vpop.xlane.xlu0 %812
      %814 = vadd.xlane.f32.xlu0 %v783
      %v815 = vpop.xlane.xlu0 %814
      %816 = vadd.xlane.f32.xlu0 %v785
      %v817 = vpop.xlane.xlu0 %816
      %818 = vadd.xlane.f32.xlu0 %v787
      %v819 = vpop.xlane.xlu0 %818
      %v820 = vpack.c.bf16 %v759, %v757
      %v821 = vpack.c.bf16 %v763, %v761
      %v822 = vpack.c.bf16 %v767, %v765
      %v823 = vpack.c.bf16 %v771, %v769
      %v824 = vpack.c.bf16 %v775, %v773
      %v825 = vpack.c.bf16 %v779, %v777
      %v826 = vpack.c.bf16 %v783, %v781
      %v827 = vpack.c.bf16 %v787, %v785
      %v844 = vunpack.c.l.b16 %v334
      %v845 = vunpack.c.l.b16 %v335
      %v846 = vunpack.c.l.b16 %v336
      %v847 = vunpack.c.l.b16 %v337
      %v848 = vunpack.c.l.b16 %v338
      %v849 = vunpack.c.l.b16 %v339
      %v850 = vunpack.c.l.b16 %v340
      %v851 = vunpack.c.l.b16 %v341
      %v852 = vunpack.c.l.b16 %v342
      %v853 = vunpack.c.l.b16 %v343
      %v854 = vunpack.c.l.b16 %v344
      %v855 = vunpack.c.l.b16 %v345
      %v856 = vunpack.c.l.b16 %v346
      %v857 = vunpack.c.l.b16 %v347
      %v858 = vunpack.c.l.b16 %v348
      %v859 = vunpack.c.l.b16 %v349
      %v860 = vpack.c.b16 %v845, %v844
      %v861 = vpack.c.b16 %v847, %v846
      %v862 = vpack.c.b16 %v849, %v848
      %v863 = vpack.c.b16 %v851, %v850
      %v864 = vpack.c.b16 %v853, %v852
      %v865 = vpack.c.b16 %v855, %v854
      %v866 = vpack.c.b16 %v857, %v856
      %v867 = vpack.c.b16 %v859, %v858
      %876 = vmatprep.subr.bf16.mxu0 0
      %877 = vmatpush1.bf16.msra.mxu0 %v860
      %878 = vmatprep.subr.bf16.mxu0 0
      %879 = vmatpush1.bf16.msra.mxu0 %v861
      %880 = vmatprep.subr.bf16.mxu0 0
      %881 = vmatpush1.bf16.msra.mxu0 %v862
      %882 = vmatprep.subr.bf16.mxu0 0
      %883 = vmatpush1.bf16.msra.mxu0 %v863
      %884 = vmatprep.subr.bf16.mxu0 0
      %885 = vmatpush1.bf16.msra.mxu0 %v864
      %886 = vmatprep.subr.bf16.mxu0 0
      %887 = vmatpush1.bf16.msra.mxu0 %v865
      %888 = vmatprep.subr.bf16.mxu0 0
      %889 = vmatpush1.bf16.msra.mxu0 %v866
      %890 = vmatprep.subr.bf16.mxu0 0
      %891 = vmatpush1.bf16.msra.mxu0 %v867
      %892 = vmatprep.subr.bf16.mxu0 0
      %893 = vmatpush1.bf16.msra.mxu0 0
      %894 = vmatprep.subr.bf16.mxu0 0
      %895 = vmatpush1.bf16.msra.mxu0 0
      %896 = vmatprep.subr.bf16.mxu0 0
      %897 = vmatpush1.bf16.msra.mxu0 0
      %898 = vmatprep.subr.bf16.mxu0 0
      %899 = vmatpush1.bf16.msra.mxu0 0
      %900 = vmatprep.subr.bf16.mxu0 0
      %901 = vmatpush1.bf16.msra.mxu0 0
      %902 = vmatprep.subr.bf16.mxu0 0
      %903 = vmatpush1.bf16.msra.mxu0 0
      %904 = vmatprep.subr.bf16.mxu0 0
      %905 = vmatpush1.bf16.msra.mxu0 0
      %906 = vmatprep.subr.bf16.mxu0 0
      %907 = vmatpush1.bf16.msra.mxu0 0
      %908 = vmatprep.mubr.bf16.mxu0 0
      %909 = vmatmul.mubr.bf16.gmra.mrb[0].mxu0 %v820
      %v910 = vpop.f32.mrb[0].mxu0
      %v911 = vadd.f32 0.0, %v910
      %v912 = vpop.f32.mrb[0].mxu0
      %v913 = vpop.f32.mrb[0].mxu0
      %v914 = vadd.f32 0.0, %v913
      %v915 = vpop.f32.mrb[0].mxu0
      %916 = vmatprep.mubr.bf16.mxu0 0
      %917 = vmatmul.mubr.bf16.gmra.mrb[0].mxu0 %v821
      %v918 = vpop.f32.mrb[0].mxu0
      %v919 = vadd.f32 0.0, %v918
      %v920 = vpop.f32.mrb[0].mxu0
      %v921 = vpop.f32.mrb[0].mxu0
      %v922 = vadd.f32 0.0, %v921
      %v923 = vpop.f32.mrb[0].mxu0
      %924 = vmatprep.mubr.bf16.mxu0 0
      %925 = vmatmul.mubr.bf16.gmra.mrb[0].mxu0 %v822
      %v926 = vpop.f32.mrb[0].mxu0
      %v927 = vadd.f32 0.0, %v926
      %v928 = vpop.f32.mrb[0].mxu0
      %v929 = vpop.f32.mrb[0].mxu0
      %v930 = vadd.f32 0.0, %v929
      %v931 = vpop.f32.mrb[0].mxu0
      %932 = vmatprep.mubr.bf16.mxu0 0
      %933 = vmatmul.mubr.bf16.gmra.mrb[0].mxu0 %v823
      %v934 = vpop.f32.mrb[0].mxu0
      %v935 = vadd.f32 0.0, %v934
      %v936 = vpop.f32.mrb[0].mxu0
      %v937 = vpop.f32.mrb[0].mxu0
      %v938 = vadd.f32 0.0, %v937
      %v939 = vpop.f32.mrb[0].mxu0
      %940 = vdwg.mxu0
      %v957 = vunpack.c.l.b16 %v350
      %v958 = vunpack.c.l.b16 %v351
      %v959 = vunpack.c.l.b16 %v352
      %v960 = vunpack.c.l.b16 %v353
      %v961 = vunpack.c.l.b16 %v354
      %v962 = vunpack.c.l.b16 %v355
      %v963 = vunpack.c.l.b16 %v356
      %v964 = vunpack.c.l.b16 %v357
      %v965 = vunpack.c.l.b16 %v358
      %v966 = vunpack.c.l.b16 %v359
      %v967 = vunpack.c.l.b16 %v360
      %v968 = vunpack.c.l.b16 %v361
      %v969 = vunpack.c.l.b16 %v362
      %v970 = vunpack.c.l.b16 %v363
      %v971 = vunpack.c.l.b16 %v364
      %v972 = vunpack.c.l.b16 %v365
      %v973 = vpack.c.b16 %v958, %v957
      %v974 = vpack.c.b16 %v960, %v959
      %v975 = vpack.c.b16 %v962, %v961
      %v976 = vpack.c.b16 %v964, %v963
      %v977 = vpack.c.b16 %v966, %v965
      %v978 = vpack.c.b16 %v968, %v967
      %v979 = vpack.c.b16 %v970, %v969
      %v980 = vpack.c.b16 %v972, %v971
      %989 = vmatprep.subr.bf16.mxu0 0
      %990 = vmatpush1.bf16.msra.mxu0 %v973
      %991 = vmatprep.subr.bf16.mxu0 0
      %992 = vmatpush1.bf16.msra.mxu0 %v974
      %993 = vmatprep.subr.bf16.mxu0 0
      %994 = vmatpush1.bf16.msra.mxu0 %v975
      %995 = vmatprep.subr.bf16.mxu0 0
      %996 = vmatpush1.bf16.msra.mxu0 %v976
      %997 = vmatprep.subr.bf16.mxu0 0
      %998 = vmatpush1.bf16.msra.mxu0 %v977
      %999 = vmatprep.subr.bf16.mxu0 0
      %1000 = vmatpush1.bf16.msra.mxu0 %v978
      %1001 = vmatprep.subr.bf16.mxu0 0
      %1002 = vmatpush1.bf16.msra.mxu0 %v979
      %1003 = vmatprep.subr.bf16.mxu0 0
      %1004 = vmatpush1.bf16.msra.mxu0 %v980
      %1005 = vmatprep.subr.bf16.mxu0 0
      %1006 = vmatpush1.bf16.msra.mxu0 0
      %1007 = vmatprep.subr.bf16.mxu0 0
      %1008 = vmatpush1.bf16.msra.mxu0 0
      %1009 = vmatprep.subr.bf16.mxu0 0
      %1010 = vmatpush1.bf16.msra.mxu0 0
      %1011 = vmatprep.subr.bf16.mxu0 0
      %1012 = vmatpush1.bf16.msra.mxu0 0
      %1013 = vmatprep.subr.bf16.mxu0 0
      %1014 = vmatpush1.bf16.msra.mxu0 0
      %1015 = vmatprep.subr.bf16.mxu0 0
      %1016 = vmatpush1.bf16.msra.mxu0 0
      %1017 = vmatprep.subr.bf16.mxu0 0
      %1018 = vmatpush1.bf16.msra.mxu0 0
      %1019 = vmatprep.subr.bf16.mxu0 0
      %1020 = vmatpush1.bf16.msra.mxu0 0
      %1021 = vmatprep.mubr.bf16.mxu0 0
      %1022 = vmatmul.mubr.bf16.gmra.mrb[0].mxu0 %v824
      %v1023 = vpop.f32.mrb[0].mxu0
      %v1024 = vadd.f32 0.0, %v1023
      %v1025 = vpop.f32.mrb[0].mxu0
      %v1026 = vpop.f32.mrb[0].mxu0
      %v1027 = vadd.f32 0.0, %v1026
      %v1028 = vpop.f32.mrb[0].mxu0
      %1029 = vmatprep.mubr.bf16.mxu0 0
      %1030 = vmatmul.mubr.bf16.gmra.mrb[0].mxu0 %v825
      %v1031 = vpop.f32.mrb[0].mxu0
      %v1032 = vadd.f32 0.0, %v1031
      %v1033 = vpop.f32.mrb[0].mxu0
      %v1034 = vpop.f32.mrb[0].mxu0
      %v1035 = vadd.f32 0.0, %v1034
      %v1036 = vpop.f32.mrb[0].mxu0
      %1037 = vmatprep.mubr.bf16.mxu0 0
      %1038 = vmatmul.mubr.bf16.gmra.mrb[0].mxu0 %v826
      %v1039 = vpop.f32.mrb[0].mxu0
      %v1040 = vadd.f32 0.0, %v1039
      %v1041 = vpop.f32.mrb[0].mxu0
      %v1042 = vpop.f32.mrb[0].mxu0
      %v1043 = vadd.f32 0.0, %v1042
      %v1044 = vpop.f32.mrb[0].mxu0
      %1045 = vmatprep.mubr.bf16.mxu0 0
      %1046 = vmatmul.mubr.bf16.gmra.mrb[0].mxu0 %v827
      %v1047 = vpop.f32.mrb[0].mxu0
      %v1048 = vadd.f32 0.0, %v1047
      %v1049 = vpop.f32.mrb[0].mxu0
      %v1050 = vpop.f32.mrb[0].mxu0
      %v1051 = vadd.f32 0.0, %v1050
      %v1052 = vpop.f32.mrb[0].mxu0
      %1053 = vdwg.mxu0
      %v1054 = vrcp.pop %v789
      %v1055 = vrcp.pop %v791
      %v1056 = vrcp.pop %v793
      %v1057 = vrcp.pop %v795
      %v1058 = vrcp.pop %v797
      %v1059 = vrcp.pop %v799
      %v1060 = vrcp.pop %v801
      %v1061 = vrcp.pop %v803
      %v1062 = vrcp.pop %v805
      %v1063 = vrcp.pop %v807
      %v1064 = vrcp.pop %v809
      %v1065 = vrcp.pop %v811
      %v1066 = vrcp.pop %v813
      %v1067 = vrcp.pop %v815
      %v1068 = vrcp.pop %v817
      %v1069 = vrcp.pop %v819
      %v1070 = vmul.f32 %v911, %v1054
      %v1071 = vmul.f32 %v914, %v1055
      %v1072 = vmul.f32 %v919, %v1056
      %v1073 = vmul.f32 %v922, %v1057
      %v1074 = vmul.f32 %v927, %v1058
      %v1075 = vmul.f32 %v930, %v1059
      %v1076 = vmul.f32 %v935, %v1060
      %v1077 = vmul.f32 %v938, %v1061
      %v1078 = vmul.f32 %v1024, %v1062
      %v1079 = vmul.f32 %v1027, %v1063
      %v1080 = vmul.f32 %v1032, %v1064
      %v1081 = vmul.f32 %v1035, %v1065
      %v1082 = vmul.f32 %v1040, %v1066
      %v1083 = vmul.f32 %v1043, %v1067
      %v1084 = vmul.f32 %v1048, %v1068
      %v1085 = vmul.f32 %v1051, %v1069
      %1086 = vst.msk [vmem:[%s265] sm:$0xff] %vm426, %v1070
      %1087 = vst.msk [vmem:[%s265 + $0x8] sm:$0xff] %vm426, %v1071
      %1088 = vst.msk [vmem:[%s265 + $0x10] sm:$0xff] %vm426, %v1072
      %1089 = vst.msk [vmem:[%s265 + $0x18] sm:$0xff] %vm426, %v1073
      %1090 = vst.msk [vmem:[%s265 + $0x20] sm:$0xff] %vm426, %v1074
      %1091 = vst.msk [vmem:[%s265 + $0x28] sm:$0xff] %vm426, %v1075
      %1092 = vst.msk [vmem:[%s265 + $0x30] sm:$0xff] %vm426, %v1076
      %1093 = vst.msk [vmem:[%s265 + $0x38] sm:$0xff] %vm426, %v1077
      %1094 = vst.msk [vmem:[%s265 + $0x40] sm:$0xff] %vm426, %v1078
      %1095 = vst.msk [vmem:[%s265 + $0x48] sm:$0xff] %vm426, %v1079
      %1096 = vst.msk [vmem:[%s265 + $0x50] sm:$0xff] %vm426, %v1080
      %1097 = vst.msk [vmem:[%s265 + $0x58] sm:$0xff] %vm426, %v1081
      %1098 = vst.msk [vmem:[%s265 + $0x60] sm:$0xff] %vm426, %v1082
      %1099 = vst.msk [vmem:[%s265 + $0x68] sm:$0xff] %vm426, %v1083
      %1100 = vst.msk [vmem:[%s265 + $0x70] sm:$0xff] %vm426, %v1084
      %1101 = vst.msk [vmem:[%s265 + $0x78] sm:$0xff] %vm426, %v1085
      %s1102 = smul.u32 2, %s18
      %s1103 = smul.u32 8, %s19
      %p1104 = scmp.lt.s32.totalorder %s1102, 3
      %s1105 = scalar_select %p1104, %s1102, 3
      %p1106 = scmp.lt.s32.totalorder %s1103, 7
      %s1107 = scalar_select %p1106, %s1103, 7
      %s1108 = smul.addr %s1105, 8
      %s1109 = sadd.s32 %s1107, %s1108
      %s1110 = smul.addr %s1109, 8
      %s1111 = scalar_lea.vmem %s3, %s1110
      // Predicated region
      $region33: #{spatial_transformer_forward.2} parent=31 // pred_check
        %p1112 = pneg %p126
      $region34: #{spatial_transformer_forward.2} parent=31 // pred_check_branch
        %1114 = sbr.rel (%p1112) target = $region36
      $region35: #{spatial_transformer_forward.2} parent=31 // pred_region
        %s1115 = smul.u32 2, %s18
        %s1116 = smul.u32 8, %s19
      $region36: #{spatial_transformer_forward.2} parent=31 // pred_fallthru
        _
    $region32: #{spatial_transformer_forward.2} parent=5 // pred_fallthru
      _
    %p1117 = scmp.le.s32.totalorder 2, %s9
    // Predicated region
    $region37: #{spatial_transformer_forward.2} parent=5 // pred_check
      %p1118 = pneg %p1117
    $region38: #{spatial_transformer_forward.2} parent=5 // pred_check_branch
      %1120 = sbr.rel (%p1118) target = $region40
    $region39: #{spatial_transformer_forward.2} parent=5 // pred_region
      %s1121 = ssub.s32 %s9, 2
      // Predicated region
      $region41: #{spatial_transformer_forward.2} parent=39 // pred_check
        %p1122 = pneg %p132
      $region42: #{spatial_transformer_forward.2} parent=39 // pred_check_branch
        %1124 = sbr.rel (%p1122) target = $region44
      $region43: #{spatial_transformer_forward.2} parent=39 // pred_region
        %s1125 = smul.u32 2, %s20
        %s1126 = smul.u32 8, %s21
        %p1127 = scmp.lt.s32.totalorder %s1125, 3
        %s1128 = scalar_select %p1127, %s1125, 3
        %p1129 = scmp.lt.s32.totalorder %s1126, 7
        %s1130 = scalar_select %p1129, %s1126, 7
        %s1131 = smul.addr %s1128, 8
        %s1132 = sadd.s32 %s1130, %s1131
        %s1133 = smul.addr %s1132, 8
        %s1134 = scalar_lea.vmem %s3, %s1133
      $region44: #{spatial_transformer_forward.2} parent=39 // pred_fallthru
        _
    $region40: #{spatial_transformer_forward.2} parent=5 // pred_fallthru
      _
  $region6: #{spatial_transformer_forward.2} parent=0 // loop_footer
    %s13 = sadd.s32 1, %s9
  $region7: #{spatial_transformer_forward.2} parent=0 // loop_footer_branch
    %8 = sbr.rel target = $region3
  $region8: #{spatial_transformer_forward.2} parent=0 // loop_exit
    _

// kernel: spatial_transformer_forward.3
$region0: #{spatial_transformer_forward.3}
  #allocation0 [shape = 'u32[]', space=smem, size = 0x4, offset = 0x4, fixed_abs, tag = 'smem constant byte address 0x4 - core index']
  #allocation1 [shape = 'u32[144,128]{1,0:T(1,128)}', space=vmem, size = 0x12000, scoped, tag = 'internal scratch']
  %s0 = inlined_call_operand.vmem [shape: bf16[4,64,16], index: 0, kind: input, shape index: {}]
  %s1 = inlined_call_operand.vmem [shape: bf16[4,128,16], index: 1, kind: input, shape index: {}]
  %s2 = inlined_call_operand.vmem [shape: bf16[4,128,16], index: 2, kind: input, shape index: {}]
  %s3 = inlined_call_operand.vmem [shape: f32[4,64,16], index: 3, kind: output, shape index: {}]
  %s4 = sld [smem:[#allocation0]]
  $region45: #{spatial_transformer_forward.3} parent=0
    _
  %s6 = ssub.s32 1, %s4
  %s7 = scalar_select 0, %s6, %s4
  loop: start=0, step=1, limit=4
  $region2: #{spatial_transformer_forward.3} parent=0 // loop_pre_header
    _
  $region3: #{spatial_transformer_forward.3} parent=0 // loop_header
    %s9 = sphi 0, %s13
    %p10 = scmp.ge.s32.totalorder %s9, 4
    %s16 = sphi 0, %s28
    %s17 = sphi 0, %s24
    %s18 = sphi 0, %s16
    %s19 = sphi 0, %s17
    %s20 = sphi 0, %s18
    %s21 = sphi 0, %s19
    %s33 = sphi 0, %s35
    %s36 = sphi 0, %s33
    %s37 = sphi 0, %s36
    %s53 = sphi 0, %s37
    %s59 = sphi 0, %s61
    %s62 = sphi 0, %s59
    %s63 = sphi 0, %s62
    %s79 = sphi 0, %s63
    %s85 = sphi 0, %s87
    %s88 = sphi 0, %s85
    %s89 = sphi 0, %s88
    %s105 = sphi 0, %s89
    %s113 = sphi 0, %s115
    %s116 = sphi 0, %s113
    %s117 = sphi 0, %s116
    %s133 = sphi 0, %s117
  $region4: #{spatial_transformer_forward.3} parent=0 // loop_header_branch
    %12 = sbr.rel (%p10) target = $region8
  $region5: #{spatial_transformer_forward.3} parent=0 // loop_body
    %s14 = ssub.s32 %s9, 1
    %s15 = ssub.s32 %s9, 2
    %s22 = sadd.s32 1, %s17
    %p23 = scmp.ge.s32.totalorder %s22, 1
    %s24 = scalar_select %p23, 0, %s22
    %s25 = sadd.s32 1, %s16
    %s26 = scalar_select %p23, %s25, %s16
    %p27 = scmp.ge.s32.totalorder %s26, 2
    %s28 = scalar_select %p27, 0, %s26
    %s29 = ssub.s32 %s16, %s28
    %s30 = ssub.s32 %s17, %s24
    %s31 = sor.u32 %s29, %s30
    %p32 = scmp.eq.s32.totalorder %s31, 0
    %s34 = sadd.s32 %s33, 1
    %s35 = scalar_select %p32, %s33, %s34
    %p38 = pneg %p32
    %p39 = scmp.eq.s32.totalorder %s9, 1
    %p40 = por %p38, %p39
    %p41 = scmp.ne.s32.totalorder %s33, %s36
    %p42 = scmp.eq.s32.totalorder %s9, 0
    %p43 = por %p41, %p42
    %p44 = scmp.ne.s32.totalorder %s33, %s36
    %p45 = scmp.eq.s32.totalorder %s14, 1
    %p46 = por %p44, %p45
    %p47 = scmp.ne.s32.totalorder %s36, %s37
    %p48 = scmp.eq.s32.totalorder %s14, 0
    %p49 = por %p47, %p48
    %p50 = scmp.ne.s32.totalorder %s36, %s37
    %p51 = scmp.eq.s32.totalorder %s15, 1
    %p52 = por %p50, %p51
    %p54 = scmp.ne.s32.totalorder %s37, %s53
    %p55 = scmp.eq.s32.totalorder %s15, 0
    %p56 = por %p54, %p55
    %s57 = ssub.s32 %s16, %s28
    %p58 = scmp.eq.s32.totalorder %s57, 0
    %s60 = sadd.s32 %s59, 1
    %s61 = scalar_select %p58, %s59, %s60
    %p64 = pneg %p58
    %p65 = scmp.eq.s32.totalorder %s9, 1
    %p66 = por %p64, %p65
    %p67 = scmp.ne.s32.totalorder %s59, %s62
    %p68 = scmp.eq.s32.totalorder %s9, 0
    %p69 = por %p67, %p68
    %p70 = scmp.ne.s32.totalorder %s59, %s62
    %p71 = scmp.eq.s32.totalorder %s14, 1
    %p72 = por %p70, %p71
    %p73 = scmp.ne.s32.totalorder %s62, %s63
    %p74 = scmp.eq.s32.totalorder %s14, 0
    %p75 = por %p73, %p74
    %p76 = scmp.ne.s32.totalorder %s62, %s63
    %p77 = scmp.eq.s32.totalorder %s15, 1
    %p78 = por %p76, %p77
    %p80 = scmp.ne.s32.totalorder %s63, %s79
    %p81 = scmp.eq.s32.totalorder %s15, 0
    %p82 = por %p80, %p81
    %s83 = ssub.s32 %s16, %s28
    %p84 = scmp.eq.s32.totalorder %s83, 0
    %s86 = sadd.s32 %s85, 1
    %s87 = scalar_select %p84, %s85, %s86
    %p90 = pneg %p84
    %p91 = scmp.eq.s32.totalorder %s9, 1
    %p92 = por %p90, %p91
    %p93 = scmp.ne.s32.totalorder %s85, %s88
    %p94 = scmp.eq.s32.totalorder %s9, 0
    %p95 = por %p93, %p94
    %p96 = scmp.ne.s32.totalorder %s85, %s88
    %p97 = scmp.eq.s32.totalorder %s14, 1
    %p98 = por %p96, %p97
    %p99 = scmp.ne.s32.totalorder %s88, %s89
    %p100 = scmp.eq.s32.totalorder %s14, 0
    %p101 = por %p99, %p100
    %p102 = scmp.ne.s32.totalorder %s88, %s89
    %p103 = scmp.eq.s32.totalorder %s15, 1
    %p104 = por %p102, %p103
    %p106 = scmp.ne.s32.totalorder %s89, %s105
    %p107 = scmp.eq.s32.totalorder %s15, 0
    %p108 = por %p106, %p107
    %s109 = ssub.s32 %s16, %s28
    %s110 = ssub.s32 %s17, %s24
    %s111 = sor.u32 %s109, %s110
    %p112 = scmp.eq.s32.totalorder %s111, 0
    %s114 = sadd.s32 %s113, 1
    %s115 = scalar_select %p112, %s113, %s114
    %p118 = pneg %p112
    %p119 = scmp.eq.s32.totalorder %s9, 1
    %p120 = por %p118, %p119
    %p121 = scmp.ne.s32.totalorder %s113, %s116
    %p122 = scmp.eq.s32.totalorder %s9, 0
    %p123 = por %p121, %p122
    %p124 = scmp.ne.s32.totalorder %s113, %s116
    %p125 = scmp.eq.s32.totalorder %s14, 1
    %p126 = por %p124, %p125
    %p127 = scmp.ne.s32.totalorder %s116, %s117
    %p128 = scmp.eq.s32.totalorder %s14, 0
    %p129 = por %p127, %p128
    %p130 = scmp.ne.s32.totalorder %s116, %s117
    %p131 = scmp.eq.s32.totalorder %s15, 1
    %p132 = por %p130, %p131
    %p134 = scmp.ne.s32.totalorder %s117, %s133
    %p135 = scmp.eq.s32.totalorder %s15, 0
    %p136 = por %p134, %p135
    %p137 = scmp.le.s32.totalorder 1, %s9
    %p138 = scmp.lt.s32.totalorder %s9, 3
    %p139 = pnand %p137, %p138
    %p140 = pneg %p139
    // Predicated region
    $region9: #{spatial_transformer_forward.3} parent=5 // pred_check
      _
    $region10: #{spatial_transformer_forward.3} parent=5 // pred_check_branch
      %142 = sbr.rel (%p139) target = $region12
    $region11: #{spatial_transformer_forward.3} parent=5 // pred_region
      %s143 = ssub.s32 %s9, 1
    $region12: #{spatial_transformer_forward.3} parent=5 // pred_fallthru
      _
    %p144 = scmp.lt.s32.totalorder %s9, 2
    // Predicated region
    $region13: #{spatial_transformer_forward.3} parent=5 // pred_check
      %p145 = pneg %p144
    $region14: #{spatial_transformer_forward.3} parent=5 // pred_check_branch
      %147 = sbr.rel (%p145) target = $region16
    $region15: #{spatial_transformer_forward.3} parent=5 // pred_region
      // Predicated region
      $region17: #{spatial_transformer_forward.3} parent=15 // pred_check
        %p148 = pneg %p43
      $region18: #{spatial_transformer_forward.3} parent=15 // pred_check_branch
        %150 = sbr.rel (%p148) target = $region20
      $region19: #{spatial_transformer_forward.3} parent=15 // pred_region
        %s151 = smul.u32 2, %s16
        %s152 = smul.u32 8, %s17
        %p153 = scmp.lt.s32.totalorder %s151, 3
        %s154 = scalar_select %p153, %s151, 3
        %p155 = scmp.lt.s32.totalorder %s152, 7
        %s156 = scalar_select %p155, %s152, 7
        %s157 = smul.addr %s154, 8
        %s158 = sadd.s32 %s156, %s157
        %s159 = smul.addr %s158, 4
        %s160 = scalar_lea.vmem %s0, %s159
        %s161 = smul.u32 2, %s16
        %s162 = smul.u32 8, %s17
      $region20: #{spatial_transformer_forward.3} parent=15 // pred_fallthru
        _
      // Predicated region
      $region21: #{spatial_transformer_forward.3} parent=15 // pred_check
        %p163 = pneg %p69
      $region22: #{spatial_transformer_forward.3} parent=15 // pred_check_branch
        %165 = sbr.rel (%p163) target = $region24
      $region23: #{spatial_transformer_forward.3} parent=15 // pred_region
        %s166 = smul.u32 2, %s16
        %p167 = scmp.lt.s32.totalorder %s166, 3
        %s168 = scalar_select %p167, %s166, 3
        %s169 = smul.addr %s168, 16
        %s170 = smul.addr %s169, 4
        %s171 = scalar_lea.vmem %s1, %s170
        %s172 = smul.u32 2, %s16
      $region24: #{spatial_transformer_forward.3} parent=15 // pred_fallthru
        _
      // Predicated region
      $region25: #{spatial_transformer_forward.3} parent=15 // pred_check
        %p173 = pneg %p95
      $region26: #{spatial_transformer_forward.3} parent=15 // pred_check_branch
        %175 = sbr.rel (%p173) target = $region28
      $region27: #{spatial_transformer_forward.3} parent=15 // pred_region
        %s176 = smul.u32 2, %s16
        %p177 = scmp.lt.s32.totalorder %s176, 3
        %s178 = scalar_select %p177, %s176, 3
        %s179 = smul.addr %s178, 16
        %s180 = smul.addr %s179, 4
        %s181 = scalar_lea.vmem %s2, %s180
        %s182 = smul.u32 2, %s16
      $region28: #{spatial_transformer_forward.3} parent=15 // pred_fallthru
        _
    $region16: #{spatial_transformer_forward.3} parent=5 // pred_fallthru
      _
    %p183 = scmp.le.s32.totalorder 1, %s9
    %p184 = scmp.lt.s32.totalorder %s9, 3
    %p185 = pnand %p183, %p184
    %p186 = pneg %p185
    // Predicated region
    $region29: #{spatial_transformer_forward.3} parent=5 // pred_check
      _
    $region30: #{spatial_transformer_forward.3} parent=5 // pred_check_branch
      %188 = sbr.rel (%p185) target = $region32
    $region31: #{spatial_transformer_forward.3} parent=5 // pred_region
      %s189 = ssub.s32 %s9, 1
      %s190 = smul.u32 2, %s18
      %s191 = smul.u32 8, %s19
      %p192 = scmp.lt.s32.totalorder %s190, 3
      %s193 = scalar_select %p192, %s190, 3
      %p194 = scmp.lt.s32.totalorder %s191, 7
      %s195 = scalar_select %p194, %s191, 7
      %s196 = smul.addr %s193, 8
      %s197 = sadd.s32 %s195, %s196
      %s198 = smul.addr %s197, 4
      %s199 = scalar_lea.vmem %s0, %s198
      %p200 = pneg %p49
      %p201 = pneg %p46
      %s202 = smul.u32 2, %s18
      %p203 = scmp.lt.s32.totalorder %s202, 3
      %s204 = scalar_select %p203, %s202, 3
      %s205 = smul.addr %s204, 16
      %s206 = smul.addr %s205, 4
      %s207 = scalar_lea.vmem %s1, %s206
      %p208 = pneg %p75
      %p209 = pneg %p72
      %s210 = smul.u32 2, %s18
      %p211 = scmp.lt.s32.totalorder %s210, 3
      %s212 = scalar_select %p211, %s210, 3
      %s213 = smul.addr %s212, 16
      %s214 = smul.addr %s213, 4
      %s215 = scalar_lea.vmem %s2, %s214
      %p216 = pneg %p101
      %p217 = pneg %p98
      %p218 = pneg %p129
      %p219 = pneg %p126
      %s220 = smul.u32 2, %s18
      %s221 = smul.u32 8, %s19
      %p222 = scmp.lt.s32.totalorder %s220, 3
      %s223 = scalar_select %p222, %s220, 3
      %p224 = scmp.lt.s32.totalorder %s221, 7
      %s225 = scalar_select %p224, %s221, 7
      %s226 = smul.addr %s223, 8
      %s227 = sadd.s32 %s225, %s226
      %s228 = smul.addr %s227, 8
      %s229 = scalar_lea.vmem %s3, %s228
      %s230 = smul.u32 2, %s18
      %s231 = smul.u32 8, %s19
      %p232 = scmp.lt.s32.totalorder %s230, 3
      %s233 = scalar_select %p232, %s230, 3
      %p234 = scmp.lt.s32.totalorder %s231, 7
      %s235 = scalar_select %p234, %s231, 7
      %s236 = smul.addr %s233, 8
      %s237 = sadd.s32 %s235, %s236
      %s238 = smul.addr %s237, 4
      %s239 = scalar_lea.vmem %s0, %s238
      %s240 = smul.u32 2, %s18
      %s241 = smul.u32 8, %s19
      %s242 = smul.u32 2, %s18
      %p243 = scmp.lt.s32.totalorder %s242, 3
      %s244 = scalar_select %p243, %s242, 3
      %s245 = smul.addr %s244, 16
      %s246 = smul.addr %s245, 4
      %s247 = scalar_lea.vmem %s1, %s246
      %s248 = smul.u32 2, %s18
      %s249 = smul.u32 2, %s18
      %p250 = scmp.lt.s32.totalorder %s249, 3
      %s251 = scalar_select %p250, %s249, 3
      %s252 = smul.addr %s251, 16
      %s253 = smul.addr %s252, 4
      %s254 = scalar_lea.vmem %s2, %s253
      %s255 = smul.u32 2, %s18
      %s256 = smul.u32 2, %s18
      %s257 = smul.u32 8, %s19
      %p258 = scmp.lt.s32.totalorder %s256, 3
      %s259 = scalar_select %p258, %s256, 3
      %p260 = scmp.lt.s32.totalorder %s257, 7
      %s261 = scalar_select %p260, %s257, 7
      %s262 = smul.addr %s259, 8
      %s263 = sadd.s32 %s261, %s262
      %s264 = smul.addr %s263, 8
      %s265 = scalar_lea.vmem %s3, %s264
      %s266 = smul.u32 2, %s18
      %s267 = smul.u32 8, %s19
      %v270 = vld [vmem:[%s239] sm:$0xf]
      %v271 = vld [vmem:[%s239 + $0x4] sm:$0xf]
      %v272 = vld [vmem:[%s239 + $0x8] sm:$0xf]
      %v273 = vld [vmem:[%s239 + $0xc] sm:$0xf]
      %v274 = vld [vmem:[%s239 + $0x10] sm:$0xf]
      %v275 = vld [vmem:[%s239 + $0x14] sm:$0xf]
      %v276 = vld [vmem:[%s239 + $0x18] sm:$0xf]
      %v277 = vld [vmem:[%s239 + $0x1c] sm:$0xf]
      %v278 = vld [vmem:[%s239 + $0x20] sm:$0xf]
      %v279 = vld [vmem:[%s239 + $0x24] sm:$0xf]
      %v280 = vld [vmem:[%s239 + $0x28] sm:$0xf]
      %v281 = vld [vmem:[%s239 + $0x2c] sm:$0xf]
      %v282 = vld [vmem:[%s239 + $0x30] sm:$0xf]
      %v283 = vld [vmem:[%s239 + $0x34] sm:$0xf]
      %v284 = vld [vmem:[%s239 + $0x38] sm:$0xf]
      %v285 = vld [vmem:[%s239 + $0x3c] sm:$0xf]
      %v286 = vmul.bf16 %v270, 1048592000
      %v287 = vmul.bf16 %v271, 1048592000
      %v288 = vmul.bf16 %v272, 1048592000
      %v289 = vmul.bf16 %v273, 1048592000
      %v290 = vmul.bf16 %v274, 1048592000
      %v291 = vmul.bf16 %v275, 1048592000
      %v292 = vmul.bf16 %v276, 1048592000
      %v293 = vmul.bf16 %v277, 1048592000
      %v294 = vmul.bf16 %v278, 1048592000
      %v295 = vmul.bf16 %v279, 1048592000
      %v296 = vmul.bf16 %v280, 1048592000
      %v297 = vmul.bf16 %v281, 1048592000
      %v298 = vmul.bf16 %v282, 1048592000
      %v299 = vmul.bf16 %v283, 1048592000
      %v300 = vmul.bf16 %v284, 1048592000
      %v301 = vmul.bf16 %v285, 1048592000
      %v302 = vld [vmem:[%s247] sm:$0xf]
      %v303 = vld [vmem:[%s247 + $0x4] sm:$0xf]
      %v304 = vld [vmem:[%s247 + $0x8] sm:$0xf]
      %v305 = vld [vmem:[%s247 + $0xc] sm:$0xf]
      %v306 = vld [vmem:[%s247 + $0x10] sm:$0xf]
      %v307 = vld [vmem:[%s247 + $0x14] sm:$0xf]
      %v308 = vld [vmem:[%s247 + $0x18] sm:$0xf]
      %v309 = vld [vmem:[%s247 + $0x1c] sm:$0xf]
      %v310 = vld [vmem:[%s247 + $0x20] sm:$0xf]
      %v311 = vld [vmem:[%s247 + $0x24] sm:$0xf]
      %v312 = vld [vmem:[%s247 + $0x28] sm:$0xf]
      %v313 = vld [vmem:[%s247 + $0x2c] sm:$0xf]
      %v314 = vld [vmem:[%s247 + $0x30] sm:$0xf]
      %v315 = vld [vmem:[%s247 + $0x34] sm:$0xf]
      %v316 = vld [vmem:[%s247 + $0x38] sm:$0xf]
      %v317 = vld [vmem:[%s247 + $0x3c] sm:$0xf]
      %v318 = vld [vmem:[%s247 + $0x40] sm:$0xf]
      %v319 = vld [vmem:[%s247 + $0x44] sm:$0xf]
      %v320 = vld [vmem:[%s247 + $0x48] sm:$0xf]
      %v321 = vld [vmem:[%s247 + $0x4c] sm:$0xf]
      %v322 = vld [vmem:[%s247 + $0x50] sm:$0xf]
      %v323 = vld [vmem:[%s247 + $0x54] sm:$0xf]
      %v324 = vld [vmem:[%s247 + $0x58] sm:$0xf]
      %v325 = vld [vmem:[%s247 + $0x5c] sm:$0xf]
      %v326 = vld [vmem:[%s247 + $0x60] sm:$0xf]
      %v327 = vld [vmem:[%s247 + $0x64] sm:$0xf]
      %v328 = vld [vmem:[%s247 + $0x68] sm:$0xf]
      %v329 = vld [vmem:[%s247 + $0x6c] sm:$0xf]
      %v330 = vld [vmem:[%s247 + $0x70] sm:$0xf]
      %v331 = vld [vmem:[%s247 + $0x74] sm:$0xf]
      %v332 = vld [vmem:[%s247 + $0x78] sm:$0xf]
      %v333 = vld [vmem:[%s247 + $0x7c] sm:$0xf]
      %v334 = vld [vmem:[%s254] sm:$0xf]
      %v335 = vld [vmem:[%s254 + $0x4] sm:$0xf]
      %v336 = vld [vmem:[%s254 + $0x8] sm:$0xf]
      %v337 = vld [vmem:[%s254 + $0xc] sm:$0xf]
      %v338 = vld [vmem:[%s254 + $0x10] sm:$0xf]
      %v339 = vld [vmem:[%s254 + $0x14] sm:$0xf]
      %v340 = vld [vmem:[%s254 + $0x18] sm:$0xf]
      %v341 = vld [vmem:[%s254 + $0x1c] sm:$0xf]
      %v342 = vld [vmem:[%s254 + $0x20] sm:$0xf]
      %v343 = vld [vmem:[%s254 + $0x24] sm:$0xf]
      %v344 = vld [vmem:[%s254 + $0x28] sm:$0xf]
      %v345 = vld [vmem:[%s254 + $0x2c] sm:$0xf]
      %v346 = vld [vmem:[%s254 + $0x30] sm:$0xf]
      %v347 = vld [vmem:[%s254 + $0x34] sm:$0xf]
      %v348 = vld [vmem:[%s254 + $0x38] sm:$0xf]
      %v349 = vld [vmem:[%s254 + $0x3c] sm:$0xf]
      %v350 = vld [vmem:[%s254 + $0x40] sm:$0xf]
      %v351 = vld [vmem:[%s254 + $0x44] sm:$0xf]
      %v352 = vld [vmem:[%s254 + $0x48] sm:$0xf]
      %v353 = vld [vmem:[%s254 + $0x4c] sm:$0xf]
      %v354 = vld [vmem:[%s254 + $0x50] sm:$0xf]
      %v355 = vld [vmem:[%s254 + $0x54] sm:$0xf]
      %v356 = vld [vmem:[%s254 + $0x58] sm:$0xf]
      %v357 = vld [vmem:[%s254 + $0x5c] sm:$0xf]
      %v358 = vld [vmem:[%s254 + $0x60] sm:$0xf]
      %v359 = vld [vmem:[%s254 + $0x64] sm:$0xf]
      %v360 = vld [vmem:[%s254 + $0x68] sm:$0xf]
      %v361 = vld [vmem:[%s254 + $0x6c] sm:$0xf]
      %v362 = vld [vmem:[%s254 + $0x70] sm:$0xf]
      %v363 = vld [vmem:[%s254 + $0x74] sm:$0xf]
      %v364 = vld [vmem:[%s254 + $0x78] sm:$0xf]
      %v365 = vld [vmem:[%s254 + $0x7c] sm:$0xf]
      %v374 = vunpack.c.l.b16 %v286
      %v375 = vunpack.c.l.b16 %v287
      %v376 = vunpack.c.l.b16 %v288
      %v377 = vunpack.c.l.b16 %v289
      %v378 = vunpack.c.l.b16 %v290
      %v379 = vunpack.c.l.b16 %v291
      %v380 = vunpack.c.l.b16 %v292
      %v381 = vunpack.c.l.b16 %v293
      %v382 = vpack.c.b16 %v375, %v374
      %v383 = vpack.c.b16 %v377, %v376
      %v384 = vpack.c.b16 %v379, %v378
      %v385 = vpack.c.b16 %v381, %v380
      %v402 = vunpack.c.l.b16 %v302
      %v403 = vunpack.c.l.b16 %v303
      %v404 = vunpack.c.l.b16 %v304
      %v405 = vunpack.c.l.b16 %v305
      %v406 = vunpack.c.l.b16 %v306
      %v407 = vunpack.c.l.b16 %v307
      %v408 = vunpack.c.l.b16 %v308
      %v409 = vunpack.c.l.b16 %v309
      %v410 = vunpack.c.l.b16 %v310
      %v411 = vunpack.c.l.b16 %v311
      %v412 = vunpack.c.l.b16 %v312
      %v413 = vunpack.c.l.b16 %v313
      %v414 = vunpack.c.l.b16 %v314
      %v415 = vunpack.c.l.b16 %v315
      %v416 = vunpack.c.l.b16 %v316
      %v417 = vunpack.c.l.b16 %v317
      %v418 = vpack.c.b16 %v403, %v402
      %v419 = vpack.c.b16 %v405, %v404
      %v420 = vpack.c.b16 %v407, %v406
      %v421 = vpack.c.b16 %v409, %v408
      %v422 = vpack.c.b16 %v411, %v410
      %v423 = vpack.c.b16 %v413, %v412
      %v424 = vpack.c.b16 %v415, %v414
      %v425 = vpack.c.b16 %v417, %v416
      %vm426 = vcmask 130048
      %v428 = vsel %vm426, %v382, 0
      %v431 = vsel %vm426, %v383, 0
      %v434 = vsel %vm426, %v384, 0
      %v437 = vsel %vm426, %v385, 0
      %v440 = vsel %vm426, %v418, 0
      %v443 = vsel %vm426, %v419, 0
      %v446 = vsel %vm426, %v420, 0
      %v449 = vsel %vm426, %v421, 0
      %v452 = vsel %vm426, %v422, 0
      %v455 = vsel %vm426, %v423, 0
      %v458 = vsel %vm426, %v424, 0
      %v461 = vsel %vm426, %v425, 0
      %463 = vmatprep.subr.bf16.mxu0 0
      %464 = vmatpush1.bf16.xpose.msra.mxu0 %v440
      %465 = vmatprep.subr.bf16.mxu0 0
      %466 = vmatpush1.bf16.xpose.msra.mxu0 %v443
      %467 = vmatprep.subr.bf16.mxu0 0
      %468 = vmatpush1.bf16.xpose.msra.mxu0 %v446
      %469 = vmatprep.subr.bf16.mxu0 0
      %470 = vmatpush1.bf16.xpose.msra.mxu0 %v449
      %471 = vmatprep.subr.bf16.mxu0 0
      %472 = vmatpush1.bf16.xpose.msra.mxu0 %v452
      %473 = vmatprep.subr.bf16.mxu0 0
      %474 = vmatpush1.bf16.xpose.msra.mxu0 %v455
      %475 = vmatprep.subr.bf16.mxu0 0
      %476 = vmatpush1.bf16.xpose.msra.mxu0 %v458
      %477 = vmatprep.subr.bf16.mxu0 0
      %478 = vmatpush1.bf16.xpose.msra.mxu0 %v461
      %479 = vmatprep.subr.bf16.mxu0 0
      %480 = vmatpush1.bf16.xpose.msra.mxu0 0
      %481 = vmatprep.subr.bf16.mxu0 0
      %482 = vmatpush1.bf16.xpose.msra.mxu0 0
      %483 = vmatprep.subr.bf16.mxu0 0
      %484 = vmatpush1.bf16.xpose.msra.mxu0 0
      %485 = vmatprep.subr.bf16.mxu0 0
      %486 = vmatpush1.bf16.xpose.msra.mxu0 0
      %487 = vmatprep.subr.bf16.mxu0 0
      %488 = vmatpush1.bf16.xpose.msra.mxu0 0
      %489 = vmatprep.subr.bf16.mxu0 0
      %490 = vmatpush1.bf16.xpose.msra.mxu0 0
      %491 = vmatprep.subr.bf16.mxu0 0
      %492 = vmatpush1.bf16.xpose.msra.mxu0 0
      %493 = vmatprep.subr.bf16.mxu0 0
      %494 = vmatpush1.bf16.xpose.msra.mxu0 0
      %495 = vmatprep.mubr.bf16.mxu0 0
      %496 = vmatmul.mubr.bf16.gmra.mrb[0].mxu0 %v428
      %v497 = vpop.f32.mrb[0].mxu0
      %v498 = vadd.f32 0.0, %v497
      %v499 = vpop.f32.mrb[0].mxu0
      %v500 = vpop.f32.mrb[0].mxu0
      %v501 = vadd.f32 0.0, %v500
      %v502 = vpop.f32.mrb[0].mxu0
      %503 = vmatprep.mubr.bf16.mxu0 0
      %504 = vmatmul.mubr.bf16.gmra.mrb[0].mxu0 %v431
      %v505 = vpop.f32.mrb[0].mxu0
      %v506 = vadd.f32 0.0, %v505
      %v507 = vpop.f32.mrb[0].mxu0
      %v508 = vpop.f32.mrb[0].mxu0
      %v509 = vadd.f32 0.0, %v508
      %v510 = vpop.f32.mrb[0].mxu0
      %511 = vmatprep.mubr.bf16.mxu0 0
      %512 = vmatmul.mubr.bf16.gmra.mrb[0].mxu0 %v434
      %v513 = vpop.f32.mrb[0].mxu0
      %v514 = vadd.f32 0.0, %v513
      %v515 = vpop.f32.mrb[0].mxu0
      %v516 = vpop.f32.mrb[0].mxu0
      %v517 = vadd.f32 0.0, %v516
      %v518 = vpop.f32.mrb[0].mxu0
      %519 = vmatprep.mubr.bf16.mxu0 0
      %520 = vmatmul.mubr.bf16.gmra.mrb[0].mxu0 %v437
      %v521 = vpop.f32.mrb[0].mxu0
      %v522 = vadd.f32 0.0, %v521
      %v523 = vpop.f32.mrb[0].mxu0
      %v524 = vpop.f32.mrb[0].mxu0
      %v525 = vadd.f32 0.0, %v524
      %v526 = vpop.f32.mrb[0].mxu0
      %527 = vdwg.mxu0
      %v536 = vunpack.c.l.b16 %v294
      %v537 = vunpack.c.l.b16 %v295
      %v538 = vunpack.c.l.b16 %v296
      %v539 = vunpack.c.l.b16 %v297
      %v540 = vunpack.c.l.b16 %v298
      %v541 = vunpack.c.l.b16 %v299
      %v542 = vunpack.c.l.b16 %v300
      %v543 = vunpack.c.l.b16 %v301
      %v544 = vpack.c.b16 %v537, %v536
      %v545 = vpack.c.b16 %v539, %v538
      %v546 = vpack.c.b16 %v541, %v540
      %v547 = vpack.c.b16 %v543, %v542
      %v564 = vunpack.c.l.b16 %v318
      %v565 = vunpack.c.l.b16 %v319
      %v566 = vunpack.c.l.b16 %v320
      %v567 = vunpack.c.l.b16 %v321
      %v568 = vunpack.c.l.b16 %v322
      %v569 = vunpack.c.l.b16 %v323
      %v570 = vunpack.c.l.b16 %v324
      %v571 = vunpack.c.l.b16 %v325
      %v572 = vunpack.c.l.b16 %v326
      %v573 = vunpack.c.l.b16 %v327
      %v574 = vunpack.c.l.b16 %v328
      %v575 = vunpack.c.l.b16 %v329
      %v576 = vunpack.c.l.b16 %v330
      %v577 = vunpack.c.l.b16 %v331
      %v578 = vunpack.c.l.b16 %v332
      %v579 = vunpack.c.l.b16 %v333
      %v580 = vpack.c.b16 %v565, %v564
      %v581 = vpack.c.b16 %v567, %v566
      %v582 = vpack.c.b16 %v569, %v568
      %v583 = vpack.c.b16 %v571, %v570
      %v584 = vpack.c.b16 %v573, %v572
      %v585 = vpack.c.b16 %v575, %v574
      %v586 = vpack.c.b16 %v577, %v576
      %v587 = vpack.c.b16 %v579, %v578
      %v589 = vsel %vm426, %v544, 0
      %v592 = vsel %vm426, %v545, 0
      %v595 = vsel %vm426, %v546, 0
      %v598 = vsel %vm426, %v547, 0
      %v601 = vsel %vm426, %v580, 0
      %v604 = vsel %vm426, %v581, 0
      %v607 = vsel %vm426, %v582, 0
      %v610 = vsel %vm426, %v583, 0
      %v613 = vsel %vm426, %v584, 0
      %v616 = vsel %vm426, %v585, 0
      %v619 = vsel %vm426, %v586, 0
      %v622 = vsel %vm426, %v587, 0
      %624 = vmatprep.subr.bf16.mxu0 0
      %625 = vmatpush1.bf16.xpose.msra.mxu0 %v601
      %626 = vmatprep.subr.bf16.mxu0 0
      %627 = vmatpush1.bf16.xpose.msra.mxu0 %v604
      %628 = vmatprep.subr.bf16.mxu0 0
      %629 = vmatpush1.bf16.xpose.msra.mxu0 %v607
      %630 = vmatprep.subr.bf16.mxu0 0
      %631 = vmatpush1.bf16.xpose.msra.mxu0 %v610
      %632 = vmatprep.subr.bf16.mxu0 0
      %633 = vmatpush1.bf16.xpose.msra.mxu0 %v613
      %634 = vmatprep.subr.bf16.mxu0 0
      %635 = vmatpush1.bf16.xpose.msra.mxu0 %v616
      %636 = vmatprep.subr.bf16.mxu0 0
      %637 = vmatpush1.bf16.xpose.msra.mxu0 %v619
      %638 = vmatprep.subr.bf16.mxu0 0
      %639 = vmatpush1.bf16.xpose.msra.mxu0 %v622
      %640 = vmatprep.subr.bf16.mxu0 0
      %641 = vmatpush1.bf16.xpose.msra.mxu0 0
      %642 = vmatprep.subr.bf16.mxu0 0
      %643 = vmatpush1.bf16.xpose.msra.mxu0 0
      %644 = vmatprep.subr.bf16.mxu0 0
      %645 = vmatpush1.bf16.xpose.msra.mxu0 0
      %646 = vmatprep.subr.bf16.mxu0 0
      %647 = vmatpush1.bf16.xpose.msra.mxu0 0
      %648 = vmatprep.subr.bf16.mxu0 0
      %649 = vmatpush1.bf16.xpose.msra.mxu0 0
      %650 = vmatprep.subr.bf16.mxu0 0
      %651 = vmatpush1.bf16.xpose.msra.mxu0 0
      %652 = vmatprep.subr.bf16.mxu0 0
      %653 = vmatpush1.bf16.xpose.msra.mxu0 0
      %654 = vmatprep.subr.bf16.mxu0 0
      %655 = vmatpush1.bf16.xpose.msra.mxu0 0
      %656 = vmatprep.mubr.bf16.mxu0 0
      %657 = vmatmul.mubr.bf16.gmra.mrb[0].mxu0 %v589
      %v658 = vpop.f32.mrb[0].mxu0
      %v659 = vadd.f32 0.0, %v658
      %v660 = vpop.f32.mrb[0].mxu0
      %v661 = vpop.f32.mrb[0].mxu0
      %v662 = vadd.f32 0.0, %v661
      %v663 = vpop.f32.mrb[0].mxu0
      %664 = vmatprep.mubr.bf16.mxu0 0
      %665 = vmatmul.mubr.bf16.gmra.mrb[0].mxu0 %v592
      %v666 = vpop.f32.mrb[0].mxu0
      %v667 = vadd.f32 0.0, %v666
      %v668 = vpop.f32.mrb[0].mxu0
      %v669 = vpop.f32.mrb[0].mxu0
      %v670 = vadd.f32 0.0, %v669
      %v671 = vpop.f32.mrb[0].mxu0
      %672 = vmatprep.mubr.bf16.mxu0 0
      %673 = vmatmul.mubr.bf16.gmra.mrb[0].mxu0 %v595
      %v674 = vpop.f32.mrb[0].mxu0
      %v675 = vadd.f32 0.0, %v674
      %v676 = vpop.f32.mrb[0].mxu0
      %v677 = vpop.f32.mrb[0].mxu0
      %v678 = vadd.f32 0.0, %v677
      %v679 = vpop.f32.mrb[0].mxu0
      %680 = vmatprep.mubr.bf16.mxu0 0
      %681 = vmatmul.mubr.bf16.gmra.mrb[0].mxu0 %v598
      %v682 = vpop.f32.mrb[0].mxu0
      %v683 = vadd.f32 0.0, %v682
      %v684 = vpop.f32.mrb[0].mxu0
      %v685 = vpop.f32.mrb[0].mxu0
      %v686 = vadd.f32 0.0, %v685
      %v687 = vpop.f32.mrb[0].mxu0
      %688 = vdwg.mxu0
      %v689 = vlaneseq
      %v690 = vand.u32 %v689, 127
      %vm691 = vcmp.lt.s32.totalorder %v690, 12
      %v692 = vsel %vm691, %v498, -1e+30
      %v693 = vsel %vm691, %v501, -1e+30
      %v694 = vsel %vm691, %v506, -1e+30
      %v695 = vsel %vm691, %v509, -1e+30
      %v696 = vsel %vm691, %v514, -1e+30
      %v697 = vsel %vm691, %v517, -1e+30
      %v698 = vsel %vm691, %v522, -1e+30
      %v699 = vsel %vm691, %v525, -1e+30
      %v700 = vsel %vm691, %v659, -1e+30
      %v701 = vsel %vm691, %v662, -1e+30
      %v702 = vsel %vm691, %v667, -1e+30
      %v703 = vsel %vm691, %v670, -1e+30
      %v704 = vsel %vm691, %v675, -1e+30
      %v705 = vsel %vm691, %v678, -1e+30
      %v706 = vsel %vm691, %v683, -1e+30
      %v707 = vsel %vm691, %v686, -1e+30
      %708 = vmax.xlane.f32.xlu0 %v692
      %v709 = vpop.xlane.xlu0 %708
      %710 = vmax.xlane.f32.xlu0 %v693
      %v711 = vpop.xlane.xlu0 %710
      %712 = vmax.xlane.f32.xlu0 %v694
      %v713 = vpop.xlane.xlu0 %712
      %714 = vmax.xlane.f32.xlu0 %v695
      %v715 = vpop.xlane.xlu0 %714
      %716 = vmax.xlane.f32.xlu0 %v696
      %v717 = vpop.xlane.xlu0 %716
      %718 = vmax.xlane.f32.xlu0 %v697
      %v719 = vpop.xlane.xlu0 %718
      %720 = vmax.xlane.f32.xlu0 %v698
      %v721 = vpop.xlane.xlu0 %720
      %722 = vmax.xlane.f32.xlu0 %v699
      %v723 = vpop.xlane.xlu0 %722
      %724 = vmax.xlane.f32.xlu0 %v700
      %v725 = vpop.xlane.xlu0 %724
      %726 = vmax.xlane.f32.xlu0 %v701
      %v727 = vpop.xlane.xlu0 %726
      %728 = vmax.xlane.f32.xlu0 %v702
      %v729 = vpop.xlane.xlu0 %728
      %730 = vmax.xlane.f32.xlu0 %v703
      %v731 = vpop.xlane.xlu0 %730
      %732 = vmax.xlane.f32.xlu0 %v704
      %v733 = vpop.xlane.xlu0 %732
      %734 = vmax.xlane.f32.xlu0 %v705
      %v735 = vpop.xlane.xlu0 %734
      %736 = vmax.xlane.f32.xlu0 %v706
      %v737 = vpop.xlane.xlu0 %736
      %738 = vmax.xlane.f32.xlu0 %v707
      %v739 = vpop.xlane.xlu0 %738
      %v740 = vsub.f32 %v692, %v709
      %v741 = vsub.f32 %v693, %v711
      %v742 = vsub.f32 %v694, %v713
      %v743 = vsub.f32 %v695, %v715
      %v744 = vsub.f32 %v696, %v717
      %v745 = vsub.f32 %v697, %v719
      %v746 = vsub.f32 %v698, %v721
      %v747 = vsub.f32 %v699, %v723
      %v748 = vsub.f32 %v700, %v725
      %v749 = vsub.f32 %v701, %v727
      %v750 = vsub.f32 %v702, %v729
      %v751 = vsub.f32 %v703, %v731
      %v752 = vsub.f32 %v704, %v733
      %v753 = vsub.f32 %v705, %v735
      %v754 = vsub.f32 %v706, %v737
      %v755 = vsub.f32 %v707, %v739
      %v756 = vmul.f32 %v740, 1.442695
      %v757 = vpow.pop %v756
      %v758 = vmul.f32 %v741, 1.442695
      %v759 = vpow.pop %v758
      %v760 = vmul.f32 %v742, 1.442695
      %v761 = vpow.pop %v760
      %v762 = vmul.f32 %v743, 1.442695
      %v763 = vpow.pop %v762
      %v764 = vmul.f32 %v744, 1.442695
      %v765 = vpow.pop %v764
      %v766 = vmul.f32 %v745, 1.442695
      %v767 = vpow.pop %v766
      %v768 = vmul.f32 %v746, 1.442695
      %v769 = vpow.pop %v768
      %v770 = vmul.f32 %v747, 1.442695
      %v771 = vpow.pop %v770
      %v772 = vmul.f32 %v748, 1.442695
      %v773 = vpow.pop %v772
      %v774 = vmul.f32 %v749, 1.442695
      %v775 = vpow.pop %v774
      %v776 = vmul.f32 %v750, 1.442695
      %v777 = vpow.pop %v776
      %v778 = vmul.f32 %v751, 1.442695
      %v779 = vpow.pop %v778
      %v780 = vmul.f32 %v752, 1.442695
      %v781 = vpow.pop %v780
      %v782 = vmul.f32 %v753, 1.442695
      %v783 = vpow.pop %v782
      %v784 = vmul.f32 %v754, 1.442695
      %v785 = vpow.pop %v784
      %v786 = vmul.f32 %v755, 1.442695
      %v787 = vpow.pop %v786
      %788 = vadd.xlane.f32.xlu0 %v757
      %v789 = vpop.xlane.xlu0 %788
      %790 = vadd.xlane.f32.xlu0 %v759
      %v791 = vpop.xlane.xlu0 %790
      %792 = vadd.xlane.f32.xlu0 %v761
      %v793 = vpop.xlane.xlu0 %792
      %794 = vadd.xlane.f32.xlu0 %v763
      %v795 = vpop.xlane.xlu0 %794
      %796 = vadd.xlane.f32.xlu0 %v765
      %v797 = vpop.xlane.xlu0 %796
      %798 = vadd.xlane.f32.xlu0 %v767
      %v799 = vpop.xlane.xlu0 %798
      %800 = vadd.xlane.f32.xlu0 %v769
      %v801 = vpop.xlane.xlu0 %800
      %802 = vadd.xlane.f32.xlu0 %v771
      %v803 = vpop.xlane.xlu0 %802
      %804 = vadd.xlane.f32.xlu0 %v773
      %v805 = vpop.xlane.xlu0 %804
      %806 = vadd.xlane.f32.xlu0 %v775
      %v807 = vpop.xlane.xlu0 %806
      %808 = vadd.xlane.f32.xlu0 %v777
      %v809 = vpop.xlane.xlu0 %808
      %810 = vadd.xlane.f32.xlu0 %v779
      %v811 = vpop.xlane.xlu0 %810
      %812 = vadd.xlane.f32.xlu0 %v781
      %v813 = vpop.xlane.xlu0 %812
      %814 = vadd.xlane.f32.xlu0 %v783
      %v815 = vpop.xlane.xlu0 %814
      %816 = vadd.xlane.f32.xlu0 %v785
      %v817 = vpop.xlane.xlu0 %816
      %818 = vadd.xlane.f32.xlu0 %v787
      %v819 = vpop.xlane.xlu0 %818
      %v820 = vpack.c.bf16 %v759, %v757
      %v821 = vpack.c.bf16 %v763, %v761
      %v822 = vpack.c.bf16 %v767, %v765
      %v823 = vpack.c.bf16 %v771, %v769
      %v824 = vpack.c.bf16 %v775, %v773
      %v825 = vpack.c.bf16 %v779, %v777
      %v826 = vpack.c.bf16 %v783, %v781
      %v827 = vpack.c.bf16 %v787, %v785
      %v844 = vunpack.c.l.b16 %v334
      %v845 = vunpack.c.l.b16 %v335
      %v846 = vunpack.c.l.b16 %v336
      %v847 = vunpack.c.l.b16 %v337
      %v848 = vunpack.c.l.b16 %v338
      %v849 = vunpack.c.l.b16 %v339
      %v850 = vunpack.c.l.b16 %v340
      %v851 = vunpack.c.l.b16 %v341
      %v852 = vunpack.c.l.b16 %v342
      %v853 = vunpack.c.l.b16 %v343
      %v854 = vunpack.c.l.b16 %v344
      %v855 = vunpack.c.l.b16 %v345
      %v856 = vunpack.c.l.b16 %v346
      %v857 = vunpack.c.l.b16 %v347
      %v858 = vunpack.c.l.b16 %v348
      %v859 = vunpack.c.l.b16 %v349
      %v860 = vpack.c.b16 %v845, %v844
      %v861 = vpack.c.b16 %v847, %v846
      %v862 = vpack.c.b16 %v849, %v848
      %v863 = vpack.c.b16 %v851, %v850
      %v864 = vpack.c.b16 %v853, %v852
      %v865 = vpack.c.b16 %v855, %v854
      %v866 = vpack.c.b16 %v857, %v856
      %v867 = vpack.c.b16 %v859, %v858
      %876 = vmatprep.subr.bf16.mxu0 0
      %877 = vmatpush1.bf16.msra.mxu0 %v860
      %878 = vmatprep.subr.bf16.mxu0 0
      %879 = vmatpush1.bf16.msra.mxu0 %v861
      %880 = vmatprep.subr.bf16.mxu0 0
      %881 = vmatpush1.bf16.msra.mxu0 %v862
      %882 = vmatprep.subr.bf16.mxu0 0
      %883 = vmatpush1.bf16.msra.mxu0 %v863
      %884 = vmatprep.subr.bf16.mxu0 0
      %885 = vmatpush1.bf16.msra.mxu0 %v864
      %886 = vmatprep.subr.bf16.mxu0 0
      %887 = vmatpush1.bf16.msra.mxu0 %v865
      %888 = vmatprep.subr.bf16.mxu0 0
      %889 = vmatpush1.bf16.msra.mxu0 %v866
      %890 = vmatprep.subr.bf16.mxu0 0
      %891 = vmatpush1.bf16.msra.mxu0 %v867
      %892 = vmatprep.subr.bf16.mxu0 0
      %893 = vmatpush1.bf16.msra.mxu0 0
      %894 = vmatprep.subr.bf16.mxu0 0
      %895 = vmatpush1.bf16.msra.mxu0 0
      %896 = vmatprep.subr.bf16.mxu0 0
      %897 = vmatpush1.bf16.msra.mxu0 0
      %898 = vmatprep.subr.bf16.mxu0 0
      %899 = vmatpush1.bf16.msra.mxu0 0
      %900 = vmatprep.subr.bf16.mxu0 0
      %901 = vmatpush1.bf16.msra.mxu0 0
      %902 = vmatprep.subr.bf16.mxu0 0
      %903 = vmatpush1.bf16.msra.mxu0 0
      %904 = vmatprep.subr.bf16.mxu0 0
      %905 = vmatpush1.bf16.msra.mxu0 0
      %906 = vmatprep.subr.bf16.mxu0 0
      %907 = vmatpush1.bf16.msra.mxu0 0
      %908 = vmatprep.mubr.bf16.mxu0 0
      %909 = vmatmul.mubr.bf16.gmra.mrb[0].mxu0 %v820
      %v910 = vpop.f32.mrb[0].mxu0
      %v911 = vadd.f32 0.0, %v910
      %v912 = vpop.f32.mrb[0].mxu0
      %v913 = vpop.f32.mrb[0].mxu0
      %v914 = vadd.f32 0.0, %v913
      %v915 = vpop.f32.mrb[0].mxu0
      %916 = vmatprep.mubr.bf16.mxu0 0
      %917 = vmatmul.mubr.bf16.gmra.mrb[0].mxu0 %v821
      %v918 = vpop.f32.mrb[0].mxu0
      %v919 = vadd.f32 0.0, %v918
      %v920 = vpop.f32.mrb[0].mxu0
      %v921 = vpop.f32.mrb[0].mxu0
      %v922 = vadd.f32 0.0, %v921
      %v923 = vpop.f32.mrb[0].mxu0
      %924 = vmatprep.mubr.bf16.mxu0 0
      %925 = vmatmul.mubr.bf16.gmra.mrb[0].mxu0 %v822
      %v926 = vpop.f32.mrb[0].mxu0
      %v927 = vadd.f32 0.0, %v926
      %v928 = vpop.f32.mrb[0].mxu0
      %v929 = vpop.f32.mrb[0].mxu0
      %v930 = vadd.f32 0.0, %v929
      %v931 = vpop.f32.mrb[0].mxu0
      %932 = vmatprep.mubr.bf16.mxu0 0
      %933 = vmatmul.mubr.bf16.gmra.mrb[0].mxu0 %v823
      %v934 = vpop.f32.mrb[0].mxu0
      %v935 = vadd.f32 0.0, %v934
      %v936 = vpop.f32.mrb[0].mxu0
      %v937 = vpop.f32.mrb[0].mxu0
      %v938 = vadd.f32 0.0, %v937
      %v939 = vpop.f32.mrb[0].mxu0
      %940 = vdwg.mxu0
      %v957 = vunpack.c.l.b16 %v350
      %v958 = vunpack.c.l.b16 %v351
      %v959 = vunpack.c.l.b16 %v352
      %v960 = vunpack.c.l.b16 %v353
      %v961 = vunpack.c.l.b16 %v354
      %v962 = vunpack.c.l.b16 %v355
      %v963 = vunpack.c.l.b16 %v356
      %v964 = vunpack.c.l.b16 %v357
      %v965 = vunpack.c.l.b16 %v358
      %v966 = vunpack.c.l.b16 %v359
      %v967 = vunpack.c.l.b16 %v360
      %v968 = vunpack.c.l.b16 %v361
      %v969 = vunpack.c.l.b16 %v362
      %v970 = vunpack.c.l.b16 %v363
      %v971 = vunpack.c.l.b16 %v364
      %v972 = vunpack.c.l.b16 %v365
      %v973 = vpack.c.b16 %v958, %v957
      %v974 = vpack.c.b16 %v960, %v959
      %v975 = vpack.c.b16 %v962, %v961
      %v976 = vpack.c.b16 %v964, %v963
      %v977 = vpack.c.b16 %v966, %v965
      %v978 = vpack.c.b16 %v968, %v967
      %v979 = vpack.c.b16 %v970, %v969
      %v980 = vpack.c.b16 %v972, %v971
      %989 = vmatprep.subr.bf16.mxu0 0
      %990 = vmatpush1.bf16.msra.mxu0 %v973
      %991 = vmatprep.subr.bf16.mxu0 0
      %992 = vmatpush1.bf16.msra.mxu0 %v974
      %993 = vmatprep.subr.bf16.mxu0 0
      %994 = vmatpush1.bf16.msra.mxu0 %v975
      %995 = vmatprep.subr.bf16.mxu0 0
      %996 = vmatpush1.bf16.msra.mxu0 %v976
      %997 = vmatprep.subr.bf16.mxu0 0
      %998 = vmatpush1.bf16.msra.mxu0 %v977
      %999 = vmatprep.subr.bf16.mxu0 0
      %1000 = vmatpush1.bf16.msra.mxu0 %v978
      %1001 = vmatprep.subr.bf16.mxu0 0
      %1002 = vmatpush1.bf16.msra.mxu0 %v979
      %1003 = vmatprep.subr.bf16.mxu0 0
      %1004 = vmatpush1.bf16.msra.mxu0 %v980
      %1005 = vmatprep.subr.bf16.mxu0 0
      %1006 = vmatpush1.bf16.msra.mxu0 0
      %1007 = vmatprep.subr.bf16.mxu0 0
      %1008 = vmatpush1.bf16.msra.mxu0 0
      %1009 = vmatprep.subr.bf16.mxu0 0
      %1010 = vmatpush1.bf16.msra.mxu0 0
      %1011 = vmatprep.subr.bf16.mxu0 0
      %1012 = vmatpush1.bf16.msra.mxu0 0
      %1013 = vmatprep.subr.bf16.mxu0 0
      %1014 = vmatpush1.bf16.msra.mxu0 0
      %1015 = vmatprep.subr.bf16.mxu0 0
      %1016 = vmatpush1.bf16.msra.mxu0 0
      %1017 = vmatprep.subr.bf16.mxu0 0
      %1018 = vmatpush1.bf16.msra.mxu0 0
      %1019 = vmatprep.subr.bf16.mxu0 0
      %1020 = vmatpush1.bf16.msra.mxu0 0
      %1021 = vmatprep.mubr.bf16.mxu0 0
      %1022 = vmatmul.mubr.bf16.gmra.mrb[0].mxu0 %v824
      %v1023 = vpop.f32.mrb[0].mxu0
      %v1024 = vadd.f32 0.0, %v1023
      %v1025 = vpop.f32.mrb[0].mxu0
      %v1026 = vpop.f32.mrb[0].mxu0
      %v1027 = vadd.f32 0.0, %v1026
      %v1028 = vpop.f32.mrb[0].mxu0
      %1029 = vmatprep.mubr.bf16.mxu0 0
      %1030 = vmatmul.mubr.bf16.gmra.mrb[0].mxu0 %v825
      %v1031 = vpop.f32.mrb[0].mxu0
      %v1032 = vadd.f32 0.0, %v1031
      %v1033 = vpop.f32.mrb[0].mxu0
      %v1034 = vpop.f32.mrb[0].mxu0
      %v1035 = vadd.f32 0.0, %v1034
      %v1036 = vpop.f32.mrb[0].mxu0
      %1037 = vmatprep.mubr.bf16.mxu0 0
      %1038 = vmatmul.mubr.bf16.gmra.mrb[0].mxu0 %v826
      %v1039 = vpop.f32.mrb[0].mxu0
      %v1040 = vadd.f32 0.0, %v1039
      %v1041 = vpop.f32.mrb[0].mxu0
      %v1042 = vpop.f32.mrb[0].mxu0
      %v1043 = vadd.f32 0.0, %v1042
      %v1044 = vpop.f32.mrb[0].mxu0
      %1045 = vmatprep.mubr.bf16.mxu0 0
      %1046 = vmatmul.mubr.bf16.gmra.mrb[0].mxu0 %v827
      %v1047 = vpop.f32.mrb[0].mxu0
      %v1048 = vadd.f32 0.0, %v1047
      %v1049 = vpop.f32.mrb[0].mxu0
      %v1050 = vpop.f32.mrb[0].mxu0
      %v1051 = vadd.f32 0.0, %v1050
      %v1052 = vpop.f32.mrb[0].mxu0
      %1053 = vdwg.mxu0
      %v1054 = vrcp.pop %v789
      %v1055 = vrcp.pop %v791
      %v1056 = vrcp.pop %v793
      %v1057 = vrcp.pop %v795
      %v1058 = vrcp.pop %v797
      %v1059 = vrcp.pop %v799
      %v1060 = vrcp.pop %v801
      %v1061 = vrcp.pop %v803
      %v1062 = vrcp.pop %v805
      %v1063 = vrcp.pop %v807
      %v1064 = vrcp.pop %v809
      %v1065 = vrcp.pop %v811
      %v1066 = vrcp.pop %v813
      %v1067 = vrcp.pop %v815
      %v1068 = vrcp.pop %v817
      %v1069 = vrcp.pop %v819
      %v1070 = vmul.f32 %v911, %v1054
      %v1071 = vmul.f32 %v914, %v1055
      %v1072 = vmul.f32 %v919, %v1056
      %v1073 = vmul.f32 %v922, %v1057
      %v1074 = vmul.f32 %v927, %v1058
      %v1075 = vmul.f32 %v930, %v1059
      %v1076 = vmul.f32 %v935, %v1060
      %v1077 = vmul.f32 %v938, %v1061
      %v1078 = vmul.f32 %v1024, %v1062
      %v1079 = vmul.f32 %v1027, %v1063
      %v1080 = vmul.f32 %v1032, %v1064
      %v1081 = vmul.f32 %v1035, %v1065
      %v1082 = vmul.f32 %v1040, %v1066
      %v1083 = vmul.f32 %v1043, %v1067
      %v1084 = vmul.f32 %v1048, %v1068
      %v1085 = vmul.f32 %v1051, %v1069
      %1086 = vst.msk [vmem:[%s265] sm:$0xff] %vm426, %v1070
      %1087 = vst.msk [vmem:[%s265 + $0x8] sm:$0xff] %vm426, %v1071
      %1088 = vst.msk [vmem:[%s265 + $0x10] sm:$0xff] %vm426, %v1072
      %1089 = vst.msk [vmem:[%s265 + $0x18] sm:$0xff] %vm426, %v1073
      %1090 = vst.msk [vmem:[%s265 + $0x20] sm:$0xff] %vm426, %v1074
      %1091 = vst.msk [vmem:[%s265 + $0x28] sm:$0xff] %vm426, %v1075
      %1092 = vst.msk [vmem:[%s265 + $0x30] sm:$0xff] %vm426, %v1076
      %1093 = vst.msk [vmem:[%s265 + $0x38] sm:$0xff] %vm426, %v1077
      %1094 = vst.msk [vmem:[%s265 + $0x40] sm:$0xff] %vm426, %v1078
      %1095 = vst.msk [vmem:[%s265 + $0x48] sm:$0xff] %vm426, %v1079
      %1096 = vst.msk [vmem:[%s265 + $0x50] sm:$0xff] %vm426, %v1080
      %1097 = vst.msk [vmem:[%s265 + $0x58] sm:$0xff] %vm426, %v1081
      %1098 = vst.msk [vmem:[%s265 + $0x60] sm:$0xff] %vm426, %v1082
      %1099 = vst.msk [vmem:[%s265 + $0x68] sm:$0xff] %vm426, %v1083
      %1100 = vst.msk [vmem:[%s265 + $0x70] sm:$0xff] %vm426, %v1084
      %1101 = vst.msk [vmem:[%s265 + $0x78] sm:$0xff] %vm426, %v1085
      %s1102 = smul.u32 2, %s18
      %s1103 = smul.u32 8, %s19
      %p1104 = scmp.lt.s32.totalorder %s1102, 3
      %s1105 = scalar_select %p1104, %s1102, 3
      %p1106 = scmp.lt.s32.totalorder %s1103, 7
      %s1107 = scalar_select %p1106, %s1103, 7
      %s1108 = smul.addr %s1105, 8
      %s1109 = sadd.s32 %s1107, %s1108
      %s1110 = smul.addr %s1109, 8
      %s1111 = scalar_lea.vmem %s3, %s1110
      // Predicated region
      $region33: #{spatial_transformer_forward.3} parent=31 // pred_check
        %p1112 = pneg %p126
      $region34: #{spatial_transformer_forward.3} parent=31 // pred_check_branch
        %1114 = sbr.rel (%p1112) target = $region36
      $region35: #{spatial_transformer_forward.3} parent=31 // pred_region
        %s1115 = smul.u32 2, %s18
        %s1116 = smul.u32 8, %s19
      $region36: #{spatial_transformer_forward.3} parent=31 // pred_fallthru
        _
    $region32: #{spatial_transformer_forward.3} parent=5 // pred_fallthru
      _
    %p1117 = scmp.le.s32.totalorder 2, %s9
    // Predicated region
    $region37: #{spatial_transformer_forward.3} parent=5 // pred_check
      %p1118 = pneg %p1117
    $region38: #{spatial_transformer_forward.3} parent=5 // pred_check_branch
      %1120 = sbr.rel (%p1118) target = $region40
    $region39: #{spatial_transformer_forward.3} parent=5 // pred_region
      %s1121 = ssub.s32 %s9, 2
      // Predicated region
      $region41: #{spatial_transformer_forward.3} parent=39 // pred_check
        %p1122 = pneg %p132
      $region42: #{spatial_transformer_forward.3} parent=39 // pred_check_branch
        %1124 = sbr.rel (%p1122) target = $region44
      $region43: #{spatial_transformer_forward.3} parent=39 // pred_region
        %s1125 = smul.u32 2, %s20
        %s1126 = smul.u32 8, %s21
        %p1127 = scmp.lt.s32.totalorder %s1125, 3
        %s1128 = scalar_select %p1127, %s1125, 3
        %p1129 = scmp.lt.s32.totalorder %s1126, 7
        %s1130 = scalar_select %p1129, %s1126, 7
        %s1131 = smul.addr %s1128, 8
        %s1132 = sadd.s32 %s1130, %s1131
        %s1133 = smul.addr %s1132, 8
        %s1134 = scalar_lea.vmem %s3, %s1133
      $region44: #{spatial_transformer_forward.3} parent=39 // pred_fallthru
        _
    $region40: #{spatial_transformer_forward.3} parent=5 // pred_fallthru
      _
  $region6: #{spatial_transformer_forward.3} parent=0 // loop_footer
    %s13 = sadd.s32 1, %s9
  $region7: #{spatial_transformer_forward.3} parent=0 // loop_footer_branch
    %8 = sbr.rel target = $region3
  $region8: #{spatial_transformer_forward.3} parent=0 // loop_exit
    _

</llo_original>
